<compile_context>
chip_gen: v7x
topology: tpu7x:2x2x1
jax: 0.10.0
libtpu: 0.0.40
codegen_flags: <defaults>
</compile_context>

<pallas_src>
import math
import jax
import jax.numpy as jnp
from jax.experimental import pallas as pl
from jax.experimental.pallas import tpu as pltpu

H1, H2, H3 = 256, 512, 512  # hidden widths of the Actor MLP
LANE = 128                  # TPU lane width (final layer padded to this)


def _round_up(x, m):
    return ((x + m - 1) // m) * m


# ----------------------------------------------------------------------------
# Kernel body: whole MLP fused per batch tile.
# 4 MXU matmuls (bf16 inputs, f32 accumulation), bf16 VPU relu, EUP tanh,
# broadcasted bound scale, lane-dense store.
# ----------------------------------------------------------------------------
def actor_kernel(x_ref, w1_ref, b1_ref, w2_ref, b2_ref, w3_ref, b3_ref,
                 w4_ref, b4_ref, bounds_ref, o_ref):
    x = x_ref[...].astype(jnp.bfloat16)

    h = jnp.dot(x, w1_ref[...], preferred_element_type=jnp.float32) + b1_ref[...]
    h = jnp.maximum(h.astype(jnp.bfloat16), 0.0)   # relu in bf16 (bit-identical)

    h = jnp.dot(h, w2_ref[...], preferred_element_type=jnp.float32) + b2_ref[...]
    h = jnp.maximum(h.astype(jnp.bfloat16), 0.0)

    h = jnp.dot(h, w3_ref[...], preferred_element_type=jnp.float32) + b3_ref[...]
    h = jnp.maximum(h.astype(jnp.bfloat16), 0.0)

    a = jnp.tanh(
        jnp.dot(h, w4_ref[...], preferred_element_type=jnp.float32) + b4_ref[...])
    o_ref[...] = (bounds_ref[...] * a).astype(o_ref.dtype)


# ----------------------------------------------------------------------------
# One-time parameter preparation (call after each optimizer update, NOT per
# forward): bf16 weights, f32 biases, lane-dense padded final layer.
# ----------------------------------------------------------------------------
def prepare_actor_params(params, action_bounds):
    """params = (w1, b1, w2, b2, w3, b3, w4, b4); weights (in, out), biases (1, out).

    Returns the prepared tuple consumed by `actor_forward`."""
    w1, b1, w2, b2, w3, b3, w4, b4 = params
    A = w4.shape[1]
    A_pad = _round_up(A, LANE)

    w1b = w1.astype(jnp.bfloat16)
    w2b = w2.astype(jnp.bfloat16)
    w3b = w3.astype(jnp.bfloat16)
    w4b = jnp.pad(w4, ((0, 0), (0, A_pad - A))).astype(jnp.bfloat16)
    b4p = jnp.pad(b4.astype(jnp.float32), ((0, 0), (0, A_pad - A)))
    bounds_p = jnp.pad(action_bounds.astype(jnp.float32), ((0, 0), (0, A_pad - A)))

    return (w1b, b1.astype(jnp.float32), w2b, b2.astype(jnp.float32),
            w3b, b3.astype(jnp.float32), w4b, b4p, bounds_p, A)


def _choose_tile_b(B, max_tile_b):
    # Balance tile sizes and target >= 2 grid programs (v7x has 2 TensorCores
    # and the batch grid is the only parallel axis), subject to the 8-sublane
    # minimum.  Padding per (ragged last) tile is < 8 rows.
    n_tiles = pl.cdiv(B, max_tile_b)
    if n_tiles < 2 and B > 8:
        n_tiles = 2
    tile_b = _round_up(pl.cdiv(B, n_tiles), 8)
    return min(tile_b, _round_up(B, 8))


# ----------------------------------------------------------------------------
# Per-call forward: single pallas_call over a balanced batch grid.
# ----------------------------------------------------------------------------
def actor_forward(states, prepared, *, max_tile_b=None, out_dtype=jnp.float32):
    """states: (..., state_dim) f32 (flattened like states.view(-1, state_dim)).

    prepared: output of `prepare_actor_params`."""
    (w1b, b1, w2b, b2, w3b, b3, w4b, b4p, bounds_p, A) = prepared
    S = w1b.shape[0]
    A_pad = w4b.shape[1]

    states = states.reshape(-1, S)          # matches states.view(-1, state_dim)
    B = states.shape[0]

    if max_tile_b is None:
        max_tile_b = 512 if B >= 1024 else 256
    tile_b = _choose_tile_b(B, max_tile_b)
    grid = (pl.cdiv(B, tile_b),)

    out_bytes = jnp.dtype(out_dtype).itemsize
    flops = 2 * B * (S * H1 + H1 * H2 + H2 * H3 + H3 * A_pad)
    bytes_accessed = (
        states.size * 4 + B * A_pad * out_bytes
        + (w1b.size + w2b.size + w3b.size + w4b.size) * 2
        + (b1.size + b2.size + b3.size + b4p.size + bounds_p.size) * 4)
    cost = pl.CostEstimate(flops=flops,
                           transcendentals=B * A_pad,
                           bytes_accessed=bytes_accessed)

    out_padded = pl.pallas_call(
        actor_kernel,
        out_shape=jax.ShapeDtypeStruct((B, A_pad), out_dtype),
        grid=grid,
        in_specs=[
            pl.BlockSpec((tile_b, S), lambda i: (i, 0)),     # x tile
            pl.BlockSpec((S, H1),     lambda i: (0, 0)),     # W1 (resident)
            pl.BlockSpec((1, H1),     lambda i: (0, 0)),     # b1
            pl.BlockSpec((H1, H2),    lambda i: (0, 0)),     # W2
            pl.BlockSpec((1, H2),     lambda i: (0, 0)),     # b2
            pl.BlockSpec((H2, H3),    lambda i: (0, 0)),     # W3
            pl.BlockSpec((1, H3),     lambda i: (0, 0)),     # b3
            pl.BlockSpec((H3, A_pad), lambda i: (0, 0)),     # W4 (padded)
            pl.BlockSpec((1, A_pad),  lambda i: (0, 0)),     # b4 (padded)
            pl.BlockSpec((1, A_pad),  lambda i: (0, 0)),     # bounds (padded)
        ],
        out_specs=pl.BlockSpec((tile_b, A_pad), lambda i: (i, 0)),
        compiler_params=pltpu.CompilerParams(
            dimension_semantics=("parallel",),
            vmem_limit_bytes=16 << 20),
        cost_estimate=cost,
    )(states, w1b, b1, w2b, b2, w3b, b3, w4b, b4p, bounds_p)

    return out_padded[:, :A]


# ----------------------------------------------------------------------------
# Reference + init helpers (for the self-test below)
# ----------------------------------------------------------------------------
def init_linear(key, fan_in, fan_out):
    """Deterministic PyTorch-style uniform(-1/sqrt(fan_in), 1/sqrt(fan_in))."""
    kw, kb = jax.random.split(key)
    bound = 1.0 / math.sqrt(fan_in)
    w = jax.random.uniform(kw, (fan_in, fan_out), jnp.float32, -bound, bound)
    b = jax.random.uniform(kb, (1, fan_out), jnp.float32, -bound, bound)
    return w, b


def reference_forward(states, params, action_bounds):
    w1, b1, w2, b2, w3, b3, w4, b4 = params
    h = jnp.maximum(states @ w1 + b1, 0.0)
    h = jnp.maximum(h @ w2 + b2, 0.0)
    h = jnp.maximum(h @ w3 + b3, 0.0)
    a = jnp.tanh(h @ w4 + b4)
    return action_bounds * a


if __name__ == "__main__":
    # Small shapes consistent with the module: nav2d-like env.
    batch = 8
    state_dim = 8
    action_dim = 4

    key = jax.random.PRNGKey(0)
    k_x, k_b, k1, k2, k3, k4 = jax.random.split(key, 6)

    states = jax.random.normal(k_x, (batch, state_dim), jnp.float32)
    # action_bounds analogous to torch.tensor(env.PARAMETERS_MAX).view(1, -1)
    action_bounds = jax.random.uniform(k_b, (1, action_dim), jnp.float32, 0.5, 2.0)

    w1, b1 = init_linear(k1, state_dim, 256)
    w2, b2 = init_linear(k2, 256, 512)
    w3, b3 = init_linear(k3, 512, 512)
    w4, b4 = init_linear(k4, 512, action_dim)
    params = (w1, b1, w2, b2, w3, b3, w4, b4)

    # One-time bf16 cast / padding of the parameters (reused across calls).
    prepared = prepare_actor_params(params, action_bounds)
    prepared = jax.block_until_ready(prepared)

    out = actor_forward(states, prepared)
    out = jax.block_until_ready(out)

    ref = reference_forward(states, params, action_bounds)
    assert out.shape == (batch, action_dim)
    # bf16 dot inputs / activations (f32 accumulation) -> loosened tolerance.
    assert jnp.allclose(out, ref, atol=3e-2, rtol=3e-2), "mismatch vs reference"

    print("KERNEL_OK")
</pallas_src>

<mosaic_0001>
module attributes {stable_mosaic.version = 11 : i64} {
  func.func @actor_kernel(%arg0: i32, %arg1: memref<8x8xf32, #tpu.memory_space<vmem>>, %arg2: memref<8x256xbf16, #tpu.memory_space<vmem>>, %arg3: memref<1x256xf32, #tpu.memory_space<vmem>>, %arg4: memref<256x512xbf16, #tpu.memory_space<vmem>>, %arg5: memref<1x512xf32, #tpu.memory_space<vmem>>, %arg6: memref<512x512xbf16, #tpu.memory_space<vmem>>, %arg7: memref<1x512xf32, #tpu.memory_space<vmem>>, %arg8: memref<512x128xbf16, #tpu.memory_space<vmem>>, %arg9: memref<1x128xf32, #tpu.memory_space<vmem>>, %arg10: memref<1x128xf32, #tpu.memory_space<vmem>>, %arg11: memref<8x128xf32, #tpu.memory_space<vmem>>) attributes {dimension_semantics = [#tpu.dimension_semantics<parallel>], iteration_bounds = array<i64: 1>, scalar_prefetch = 0 : i64, scratch_operands = 0 : i64, tpu.core_type = #tpu.core_type<tc>, window_params = [{transform_indices = @transform_0, window_bounds = array<i64: 8, 8>}, {pipeline_mode = #tpu.pipeline_mode<synchronous>, transform_indices = @transform_1, window_bounds = array<i64: 8, 256>}, {pipeline_mode = #tpu.pipeline_mode<synchronous>, transform_indices = @transform_2, window_bounds = array<i64: 1, 256>}, {pipeline_mode = #tpu.pipeline_mode<synchronous>, transform_indices = @transform_3, window_bounds = array<i64: 256, 512>}, {pipeline_mode = #tpu.pipeline_mode<synchronous>, transform_indices = @transform_4, window_bounds = array<i64: 1, 512>}, {pipeline_mode = #tpu.pipeline_mode<synchronous>, transform_indices = @transform_5, window_bounds = array<i64: 512, 512>}, {pipeline_mode = #tpu.pipeline_mode<synchronous>, transform_indices = @transform_6, window_bounds = array<i64: 1, 512>}, {pipeline_mode = #tpu.pipeline_mode<synchronous>, transform_indices = @transform_7, window_bounds = array<i64: 512, 128>}, {pipeline_mode = #tpu.pipeline_mode<synchronous>, transform_indices = @transform_8, window_bounds = array<i64: 1, 128>}, {pipeline_mode = #tpu.pipeline_mode<synchronous>, transform_indices = @transform_9, window_bounds = array<i64: 1, 128>}, {transform_indices = @transform_10, window_bounds = array<i64: 8, 128>}]} {
    %c0 = arith.constant 0 : index
    %c0_0 = arith.constant 0 : index
    %0 = vector.load %arg1[%c0, %c0_0] : memref<8x8xf32, #tpu.memory_space<vmem>>, vector<8x8xf32>
    %1 = arith.truncf %0 : vector<8x8xf32> to vector<8x8xbf16>
    %c0_1 = arith.constant 0 : index
    %c0_2 = arith.constant 0 : index
    %2 = vector.load %arg2[%c0_1, %c0_2] : memref<8x256xbf16, #tpu.memory_space<vmem>>, vector<8x256xbf16>
    %cst = arith.constant dense<0.000000e+00> : vector<8x256xf32>
    %3 = tpu.matmul %1, %2, %cst {dimension_numbers = #tpu.dot_dimension_numbers<[1], [0], [0], [1], [0, 0, 1, 1], [], []>} : vector<8x8xbf16>, vector<8x256xbf16>, vector<8x256xf32> -> vector<8x256xf32>
    %c0_3 = arith.constant 0 : index
    %c0_4 = arith.constant 0 : index
    %4 = vector.load %arg3[%c0_3, %c0_4] : memref<1x256xf32, #tpu.memory_space<vmem>>, vector<1x256xf32>
    %5 = vector.broadcast %4 : vector<1x256xf32> to vector<8x256xf32>
    %6 = arith.addf %3, %5 : vector<8x256xf32>
    %7 = arith.truncf %6 : vector<8x256xf32> to vector<8x256xbf16>
    %cst_5 = arith.constant 0.000000e+00 : bf16
    %8 = vector.broadcast %cst_5 : bf16 to vector<8x256xbf16>
    %9 = arith.maximumf %7, %8 : vector<8x256xbf16>
    %c0_6 = arith.constant 0 : index
    %c0_7 = arith.constant 0 : index
    %10 = vector.load %arg4[%c0_6, %c0_7] : memref<256x512xbf16, #tpu.memory_space<vmem>>, vector<256x512xbf16>
    %cst_8 = arith.constant dense<0.000000e+00> : vector<8x512xf32>
    %11 = tpu.matmul %9, %10, %cst_8 {dimension_numbers = #tpu.dot_dimension_numbers<[1], [0], [0], [1], [0, 0, 1, 1], [], []>} : vector<8x256xbf16>, vector<256x512xbf16>, vector<8x512xf32> -> vector<8x512xf32>
    %c0_9 = arith.constant 0 : index
    %c0_10 = arith.constant 0 : index
    %12 = vector.load %arg5[%c0_9, %c0_10] : memref<1x512xf32, #tpu.memory_space<vmem>>, vector<1x512xf32>
    %13 = vector.broadcast %12 : vector<1x512xf32> to vector<8x512xf32>
    %14 = arith.addf %11, %13 : vector<8x512xf32>
    %15 = arith.truncf %14 : vector<8x512xf32> to vector<8x512xbf16>
    %cst_11 = arith.constant 0.000000e+00 : bf16
    %16 = vector.broadcast %cst_11 : bf16 to vector<8x512xbf16>
    %17 = arith.maximumf %15, %16 : vector<8x512xbf16>
    %c0_12 = arith.constant 0 : index
    %c0_13 = arith.constant 0 : index
    %18 = vector.load %arg6[%c0_12, %c0_13] : memref<512x512xbf16, #tpu.memory_space<vmem>>, vector<512x512xbf16>
    %cst_14 = arith.constant dense<0.000000e+00> : vector<8x512xf32>
    %19 = tpu.matmul %17, %18, %cst_14 {dimension_numbers = #tpu.dot_dimension_numbers<[1], [0], [0], [1], [0, 0, 1, 1], [], []>} : vector<8x512xbf16>, vector<512x512xbf16>, vector<8x512xf32> -> vector<8x512xf32>
    %c0_15 = arith.constant 0 : index
    %c0_16 = arith.constant 0 : index
    %20 = vector.load %arg7[%c0_15, %c0_16] : memref<1x512xf32, #tpu.memory_space<vmem>>, vector<1x512xf32>
    %21 = vector.broadcast %20 : vector<1x512xf32> to vector<8x512xf32>
    %22 = arith.addf %19, %21 : vector<8x512xf32>
    %23 = arith.truncf %22 : vector<8x512xf32> to vector<8x512xbf16>
    %cst_17 = arith.constant 0.000000e+00 : bf16
    %24 = vector.broadcast %cst_17 : bf16 to vector<8x512xbf16>
    %25 = arith.maximumf %23, %24 : vector<8x512xbf16>
    %c0_18 = arith.constant 0 : index
    %c0_19 = arith.constant 0 : index
    %26 = vector.load %arg8[%c0_18, %c0_19] : memref<512x128xbf16, #tpu.memory_space<vmem>>, vector<512x128xbf16>
    %cst_20 = arith.constant dense<0.000000e+00> : vector<8x128xf32>
    %27 = tpu.matmul %25, %26, %cst_20 {dimension_numbers = #tpu.dot_dimension_numbers<[1], [0], [0], [1], [0, 0, 1, 1], [], []>} : vector<8x512xbf16>, vector<512x128xbf16>, vector<8x128xf32> -> vector<8x128xf32>
    %c0_21 = arith.constant 0 : index
    %c0_22 = arith.constant 0 : index
    %28 = vector.load %arg9[%c0_21, %c0_22] : memref<1x128xf32, #tpu.memory_space<vmem>>, vector<1x128xf32>
    %29 = vector.broadcast %28 : vector<1x128xf32> to vector<8x128xf32>
    %30 = arith.addf %27, %29 : vector<8x128xf32>
    %31 = math.tanh %30 : vector<8x128xf32>
    %c0_23 = arith.constant 0 : index
    %c0_24 = arith.constant 0 : index
    %32 = vector.load %arg10[%c0_23, %c0_24] : memref<1x128xf32, #tpu.memory_space<vmem>>, vector<1x128xf32>
    %33 = vector.broadcast %32 : vector<1x128xf32> to vector<8x128xf32>
    %34 = arith.mulf %33, %31 : vector<8x128xf32>
    %c0_25 = arith.constant 0 : index
    %c0_26 = arith.constant 0 : index
    %35 = vector.load %arg11[%c0_25, %c0_26] : memref<8x128xf32, #tpu.memory_space<vmem>>, vector<8x128xf32>
    tpu.vector_store %arg11[%c0_25, %c0_26], %34 {strides = array<i32>} : memref<8x128xf32, #tpu.memory_space<vmem>>, vector<8x128xf32>,
    return
  }
  func.func @transform_0(%arg0: i32) -> (i32, i32) {
    %c0_i32 = arith.constant 0 : i32
    %c0_i32_0 = arith.constant 0 : i32
    return %arg0, %c0_i32 : i32, i32
  }
  func.func @transform_1(%arg0: i32) -> (i32, i32) {
    %c0_i32 = arith.constant 0 : i32
    %c0_i32_0 = arith.constant 0 : i32
    %c0_i32_1 = arith.constant 0 : i32
    return %c0_i32, %c0_i32_0 : i32, i32
  }
  func.func @transform_2(%arg0: i32) -> (i32, i32) {
    %c0_i32 = arith.constant 0 : i32
    %c0_i32_0 = arith.constant 0 : i32
    %c0_i32_1 = arith.constant 0 : i32
    return %c0_i32, %c0_i32_0 : i32, i32
  }
  func.func @transform_3(%arg0: i32) -> (i32, i32) {
    %c0_i32 = arith.constant 0 : i32
    %c0_i32_0 = arith.constant 0 : i32
    %c0_i32_1 = arith.constant 0 : i32
    return %c0_i32, %c0_i32_0 : i32, i32
  }
  func.func @transform_4(%arg0: i32) -> (i32, i32) {
    %c0_i32 = arith.constant 0 : i32
    %c0_i32_0 = arith.constant 0 : i32
    %c0_i32_1 = arith.constant 0 : i32
    return %c0_i32, %c0_i32_0 : i32, i32
  }
  func.func @transform_5(%arg0: i32) -> (i32, i32) {
    %c0_i32 = arith.constant 0 : i32
    %c0_i32_0 = arith.constant 0 : i32
    %c0_i32_1 = arith.constant 0 : i32
    return %c0_i32, %c0_i32_0 : i32, i32
  }
  func.func @transform_6(%arg0: i32) -> (i32, i32) {
    %c0_i32 = arith.constant 0 : i32
    %c0_i32_0 = arith.constant 0 : i32
    %c0_i32_1 = arith.constant 0 : i32
    return %c0_i32, %c0_i32_0 : i32, i32
  }
  func.func @transform_7(%arg0: i32) -> (i32, i32) {
    %c0_i32 = arith.constant 0 : i32
    %c0_i32_0 = arith.constant 0 : i32
    %c0_i32_1 = arith.constant 0 : i32
    return %c0_i32, %c0_i32_0 : i32, i32
  }
  func.func @transform_8(%arg0: i32) -> (i32, i32) {
    %c0_i32 = arith.constant 0 : i32
    %c0_i32_0 = arith.constant 0 : i32
    %c0_i32_1 = arith.constant 0 : i32
    return %c0_i32, %c0_i32_0 : i32, i32
  }
  func.func @transform_9(%arg0: i32) -> (i32, i32) {
    %c0_i32 = arith.constant 0 : i32
    %c0_i32_0 = arith.constant 0 : i32
    %c0_i32_1 = arith.constant 0 : i32
    return %c0_i32, %c0_i32_0 : i32, i32
  }
  func.func @transform_10(%arg0: i32) -> (i32, i32) {
    %c0_i32 = arith.constant 0 : i32
    %c0_i32_0 = arith.constant 0 : i32
    return %arg0, %c0_i32 : i32, i32
  }
}

</mosaic_0001>

<llo_original>
// kernel: tpu_custom_call.1
$region0: #{tpu_custom_call.1}
  #allocation0 [shape = 'u32[]', space=smem, size = 0x4, offset = 0x4, fixed_abs, tag = 'smem constant byte address 0x4 - core index']
  #allocation1 [shape = 'u32[144,128]{1,0:T(1,128)}', space=vmem, size = 0x12000, scoped, tag = 'internal scratch']
  %s0 = inlined_call_operand.hbm [shape: f32[8,8], index: 0, kind: input, shape index: {}]
  %s1 = inlined_call_operand.hbm [shape: bf16[8,256], index: 1, kind: input, shape index: {}]
  %s2 = inlined_call_operand.vmem [shape: f32[1,256], index: 2, kind: input, shape index: {}]
  %s3 = inlined_call_operand.hbm [shape: bf16[256,512], index: 3, kind: input, shape index: {}]
  %s4 = inlined_call_operand.vmem [shape: f32[1,512], index: 4, kind: input, shape index: {}]
  %s5 = inlined_call_operand.hbm [shape: bf16[512,512], index: 5, kind: input, shape index: {}]
  %s6 = inlined_call_operand.vmem [shape: f32[1,512], index: 6, kind: input, shape index: {}]
  %s7 = inlined_call_operand.hbm [shape: bf16[512,128], index: 7, kind: input, shape index: {}]
  %s8 = inlined_call_operand.vmem [shape: f32[1,128], index: 8, kind: input, shape index: {}]
  %s9 = inlined_call_operand.vmem [shape: f32[1,128], index: 9, kind: input, shape index: {}]
  %s10 = inlined_call_operand.hbm [shape: f32[8,128], index: 10, kind: output, shape index: {}]
  %s11 = sld [smem:[#allocation0]]
  $region70: #{tpu_custom_call.1} parent=0
    _
  %s13 = ssub.s32 1, %s11
  %s14 = scalar_select 0, %s13, %s11
  $region1: #{tpu_custom_call.1} parent=0
    #allocation2 [shape = 'u8[4096]{0}', space=vmem, size = 0x1000, scoped, tag = 'input window, operand 0, single buffered']
    #allocation3 [shape = 's32[1]{0}', space=sflag, size = 0x4, scoped, tag = 'scoped memory for tpu_custom_call.1']
    #allocation4 [shape = 's32[1]{0}', space=sflag, size = 0x4, scoped, tag = 'scoped memory for tpu_custom_call.1']
    #allocation5 [shape = 'u8[4096]{0}', space=vmem, size = 0x1000, scoped, tag = 'input window, operand 1, single buffered']
    #allocation6 [shape = 's32[1]{0}', space=sflag, size = 0x4, scoped, tag = 'scoped memory for tpu_custom_call.1']
    #allocation7 [shape = 'u8[262144]{0}', space=vmem, size = 0x40000, scoped, tag = 'input window, operand 3, single buffered']
    #allocation8 [shape = 'u8[524288]{0}', space=vmem, size = 0x80000, scoped, tag = 'input window, operand 5, single buffered']
    #allocation9 [shape = 's32[1]{0}', space=sflag, size = 0x4, scoped, tag = 'scoped memory for tpu_custom_call.1']
    #allocation10 [shape = 'u8[131072]{0}', space=vmem, size = 0x20000, scoped, tag = 'input window, operand 7, single buffered']
    #allocation11 [shape = 'u8[4096]{0}', space=vmem, size = 0x1000, scoped, tag = 'output window, operand 0, single buffered']
    %15 = vsyncpa [#allocation3], 0
    %16 = vsyncpa [#allocation6], 0
    %17 = vsyncpa [#allocation9], 0
    %18 = vsyncpa [#allocation4], 0
    // Predicated region
    $region2: #{tpu_custom_call.1} parent=1 // pred_check
      _
    $region3: #{tpu_custom_call.1} parent=1 // pred_check_branch
      %20 = sbr.rel (0) target = $region5
    $region4: #{tpu_custom_call.1} parent=1 // pred_region
      %s22 = ssub.s32 128, 128
      %23 = vsyncadd [#allocation3], %s22
      %s25 = sshll.u32 [#allocation2], 4
      %s26 = int_to_ptr.vmem [resolvable:$true] %s25
      %28 = dma.hbm_to_vmem [thread:$0]  %s0, 128, %s26, [#allocation3]
    $region5: #{tpu_custom_call.1} parent=1 // pred_fallthru
      _
    // Predicated region
    $region6: #{tpu_custom_call.1} parent=1 // pred_check
      _
    $region7: #{tpu_custom_call.1} parent=1 // pred_check_branch
      %30 = sbr.rel (0) target = $region9
    $region8: #{tpu_custom_call.1} parent=1 // pred_region
      %s32 = ssub.s32 128, 128
      %33 = vsyncadd [#allocation6], %s32
      %s35 = sshll.u32 [#allocation5], 4
      %s36 = int_to_ptr.vmem [resolvable:$true] %s35
      %38 = dma.hbm_to_vmem [thread:$0]  %s1, 128, %s36, [#allocation6]
    $region9: #{tpu_custom_call.1} parent=1 // pred_fallthru
      _
    // Predicated region
    $region10: #{tpu_custom_call.1} parent=1 // pred_check
      _
    $region11: #{tpu_custom_call.1} parent=1 // pred_check_branch
      %40 = sbr.rel (0) target = $region13
    $region12: #{tpu_custom_call.1} parent=1 // pred_region
      _
    $region13: #{tpu_custom_call.1} parent=1 // pred_fallthru
      _
    // Predicated region
    $region14: #{tpu_custom_call.1} parent=1 // pred_check
      _
    $region15: #{tpu_custom_call.1} parent=1 // pred_check_branch
      %42 = sbr.rel (0) target = $region17
    $region16: #{tpu_custom_call.1} parent=1 // pred_region
      %s44 = ssub.s32 8192, 8192
      %45 = vsyncadd [#allocation6], %s44
      %s46 = sshll.u32 [#allocation7], 4
      %s47 = int_to_ptr.vmem [resolvable:$true] %s46
      %52 = dma.hbm_to_vmem [thread:$0]  %s3, 8192, %s47, [#allocation6], 256, 256, 16
    $region17: #{tpu_custom_call.1} parent=1 // pred_fallthru
      _
    // Predicated region
    $region18: #{tpu_custom_call.1} parent=1 // pred_check
      _
    $region19: #{tpu_custom_call.1} parent=1 // pred_check_branch
      %54 = sbr.rel (0) target = $region21
    $region20: #{tpu_custom_call.1} parent=1 // pred_region
      _
    $region21: #{tpu_custom_call.1} parent=1 // pred_fallthru
      _
    // Predicated region
    $region22: #{tpu_custom_call.1} parent=1 // pred_check
      _
    $region23: #{tpu_custom_call.1} parent=1 // pred_check_branch
      %56 = sbr.rel (0) target = $region25
    $region24: #{tpu_custom_call.1} parent=1 // pred_region
      %s58 = ssub.s32 16384, 16384
      %59 = vsyncadd [#allocation9], %s58
      %s60 = sshll.u32 [#allocation8], 4
      %s61 = int_to_ptr.vmem [resolvable:$true] %s60
      %66 = dma.hbm_to_vmem [thread:$0]  %s5, 16384, %s61, [#allocation9], 256, 256, 16
    $region25: #{tpu_custom_call.1} parent=1 // pred_fallthru
      _
    // Predicated region
    $region26: #{tpu_custom_call.1} parent=1 // pred_check
      _
    $region27: #{tpu_custom_call.1} parent=1 // pred_check_branch
      %68 = sbr.rel (0) target = $region29
    $region28: #{tpu_custom_call.1} parent=1 // pred_region
      _
    $region29: #{tpu_custom_call.1} parent=1 // pred_fallthru
      _
    // Predicated region
    $region30: #{tpu_custom_call.1} parent=1 // pred_check
      _
    $region31: #{tpu_custom_call.1} parent=1 // pred_check_branch
      %70 = sbr.rel (0) target = $region33
    $region32: #{tpu_custom_call.1} parent=1 // pred_region
      %s72 = ssub.s32 4096, 4096
      %73 = vsyncadd [#allocation9], %s72
      %s74 = sshll.u32 [#allocation10], 4
      %s75 = int_to_ptr.vmem [resolvable:$true] %s74
      %80 = dma.hbm_to_vmem [thread:$0]  %s7, 4096, %s75, [#allocation9], 64, 64, 4
    $region33: #{tpu_custom_call.1} parent=1 // pred_fallthru
      _
    // Predicated region
    $region34: #{tpu_custom_call.1} parent=1 // pred_check
      _
    $region35: #{tpu_custom_call.1} parent=1 // pred_check_branch
      %82 = sbr.rel (0) target = $region37
    $region36: #{tpu_custom_call.1} parent=1 // pred_region
      _
    $region37: #{tpu_custom_call.1} parent=1 // pred_fallthru
      _
    // Predicated region
    $region38: #{tpu_custom_call.1} parent=1 // pred_check
      _
    $region39: #{tpu_custom_call.1} parent=1 // pred_check_branch
      %84 = sbr.rel (0) target = $region41
    $region40: #{tpu_custom_call.1} parent=1 // pred_region
      _
    $region41: #{tpu_custom_call.1} parent=1 // pred_fallthru
      _
    // Predicated region
    $region42: #{tpu_custom_call.1} parent=1 // pred_check
      _
    $region43: #{tpu_custom_call.1} parent=1 // pred_check_branch
      %86 = sbr.rel (0) target = $region45
    $region44: #{tpu_custom_call.1} parent=1 // pred_region
      %87 = dma.done [#allocation3], 128
    $region45: #{tpu_custom_call.1} parent=1 // pred_fallthru
      _
    // Predicated region
    $region46: #{tpu_custom_call.1} parent=1 // pred_check
      _
    $region47: #{tpu_custom_call.1} parent=1 // pred_check_branch
      %89 = sbr.rel (0) target = $region49
    $region48: #{tpu_custom_call.1} parent=1 // pred_region
      %90 = dma.done [#allocation6], 128
    $region49: #{tpu_custom_call.1} parent=1 // pred_fallthru
      _
    // Predicated region
    $region50: #{tpu_custom_call.1} parent=1 // pred_check
      _
    $region51: #{tpu_custom_call.1} parent=1 // pred_check_branch
      %92 = sbr.rel (0) target = $region53
    $region52: #{tpu_custom_call.1} parent=1 // pred_region
      %93 = dma.done [#allocation6], 8192
    $region53: #{tpu_custom_call.1} parent=1 // pred_fallthru
      _
    // Predicated region
    $region54: #{tpu_custom_call.1} parent=1 // pred_check
      _
    $region55: #{tpu_custom_call.1} parent=1 // pred_check_branch
      %95 = sbr.rel (0) target = $region57
    $region56: #{tpu_custom_call.1} parent=1 // pred_region
      %96 = dma.done [#allocation9], 16384
    $region57: #{tpu_custom_call.1} parent=1 // pred_fallthru
      _
    // Predicated region
    $region58: #{tpu_custom_call.1} parent=1 // pred_check
      _
    $region59: #{tpu_custom_call.1} parent=1 // pred_check_branch
      %98 = sbr.rel (0) target = $region61
    $region60: #{tpu_custom_call.1} parent=1 // pred_region
      %99 = dma.done [#allocation9], 4096
    $region61: #{tpu_custom_call.1} parent=1 // pred_fallthru
      _
    %v101 = vld [vmem:[#allocation2] sm:$0xff]
    %v102 = vpack.c.bf16 %v101, %v101
    %v103 = vld [vmem:[#allocation5] sm:$0xff]
    %v104 = vld [vmem:[%s2] sm:$0x3]
    %v106 = vlaneseq
    %v107 = vshrl.u32 %v106, 7
    %v108 = vsub.s32 0, %v107
    %v109 = vrot.slane %v104, %v108
    %v110 = vlaneseq
    %v111 = vshrl.u32 %v110, 7
    %v112 = vsub.s32 1, %v111
    %v113 = vrot.slane %v104, %v112
    %v117 = vunpack.c.l.b16 %v103
    %v118 = vunpack.c.h.b16 %v103
    %v119 = vpack.c.b16 %v117, %v117
    %v120 = vpack.c.b16 %v118, %v118
    %vm121 = vcmask 64512
    %v123 = vsel %vm121, %v102, 0
    %vm125 = vcmask 1043456
    %v127 = vsel %vm125, %v119, 0
    %v130 = vsel %vm125, %v120, 0
    %132 = vmatprep.subr.bf16.mxu0 %v130
    %133 = vmatpush1.bf16.msra.mxu0 %v127
    %134 = vmatprep.subr.bf16.mxu0 0
    %135 = vmatpush1.bf16.msra.mxu0 0
    %136 = vmatprep.subr.bf16.mxu0 0
    %137 = vmatpush1.bf16.msra.mxu0 0
    %138 = vmatprep.subr.bf16.mxu0 0
    %139 = vmatpush1.bf16.msra.mxu0 0
    %140 = vmatprep.subr.bf16.mxu0 0
    %141 = vmatpush1.bf16.msra.mxu0 0
    %142 = vmatprep.subr.bf16.mxu0 0
    %143 = vmatpush1.bf16.msra.mxu0 0
    %144 = vmatprep.subr.bf16.mxu0 0
    %145 = vmatpush1.bf16.msra.mxu0 0
    %146 = vmatprep.subr.bf16.mxu0 0
    %147 = vmatpush1.bf16.msra.mxu0 0
    %148 = vmatprep.subr.bf16.mxu0 0
    %149 = vmatpush1.bf16.msra.mxu0 0
    %150 = vmatprep.subr.bf16.mxu0 0
    %151 = vmatpush1.bf16.msra.mxu0 0
    %152 = vmatprep.subr.bf16.mxu0 0
    %153 = vmatpush1.bf16.msra.mxu0 0
    %154 = vmatprep.subr.bf16.mxu0 0
    %155 = vmatpush1.bf16.msra.mxu0 0
    %156 = vmatprep.subr.bf16.mxu0 0
    %157 = vmatpush1.bf16.msra.mxu0 0
    %158 = vmatprep.subr.bf16.mxu0 0
    %159 = vmatpush1.bf16.msra.mxu0 0
    %160 = vmatprep.subr.bf16.mxu0 0
    %161 = vmatpush1.bf16.msra.mxu0 0
    %162 = vmatprep.subr.bf16.mxu0 0
    %163 = vmatpush1.bf16.msra.mxu0 0
    %164 = vmatprep.mubr.bf16.mxu0 0
    %165 = vmatmul.mubr.bf16.gmra.mrb[0].mxu0 %v123
    %v166 = vpop.f32.mrb[0].mxu0
    %v167 = vadd.f32 %v109, %v166
    %v168 = vpop.f32.mrb[0].mxu0
    %v169 = vadd.f32 %v113, %v168
    %v170 = vpop.f32.mrb[0].mxu0
    %v171 = vpop.f32.mrb[0].mxu0
    %172 = vdwg.mxu0
    %v173 = vpack.c.bf16 %v167, %v167
    %v174 = vpack.c.bf16 %v169, %v169
    %v175 = vmax.bf16 %v173, 0
    %v176 = vmax.bf16 %v174, 0
    %v177 = vld [vmem:[#allocation7] sm:$0xff]
    %v178 = vld [vmem:[#allocation7 + $0x8] sm:$0xff]
    %v179 = vld [vmem:[#allocation7 + $0x10] sm:$0xff]
    %v180 = vld [vmem:[#allocation7 + $0x18] sm:$0xff]
    %v181 = vld [vmem:[#allocation7 + $0x20] sm:$0xff]
    %v182 = vld [vmem:[#allocation7 + $0x28] sm:$0xff]
    %v183 = vld [vmem:[#allocation7 + $0x30] sm:$0xff]
    %v184 = vld [vmem:[#allocation7 + $0x38] sm:$0xff]
    %v185 = vld [vmem:[#allocation7 + $0x40] sm:$0xff]
    %v186 = vld [vmem:[#allocation7 + $0x48] sm:$0xff]
    %v187 = vld [vmem:[#allocation7 + $0x50] sm:$0xff]
    %v188 = vld [vmem:[#allocation7 + $0x58] sm:$0xff]
    %v189 = vld [vmem:[#allocation7 + $0x60] sm:$0xff]
    %v190 = vld [vmem:[#allocation7 + $0x68] sm:$0xff]
    %v191 = vld [vmem:[#allocation7 + $0x70] sm:$0xff]
    %v192 = vld [vmem:[#allocation7 + $0x78] sm:$0xff]
    %v193 = vld [vmem:[#allocation7 + $0x80] sm:$0xff]
    %v194 = vld [vmem:[#allocation7 + $0x88] sm:$0xff]
    %v195 = vld [vmem:[#allocation7 + $0x90] sm:$0xff]
    %v196 = vld [vmem:[#allocation7 + $0x98] sm:$0xff]
    %v197 = vld [vmem:[#allocation7 + $0xa0] sm:$0xff]
    %v198 = vld [vmem:[#allocation7 + $0xa8] sm:$0xff]
    %v199 = vld [vmem:[#allocation7 + $0xb0] sm:$0xff]
    %v200 = vld [vmem:[#allocation7 + $0xb8] sm:$0xff]
    %v201 = vld [vmem:[#allocation7 + $0xc0] sm:$0xff]
    %v202 = vld [vmem:[#allocation7 + $0xc8] sm:$0xff]
    %v203 = vld [vmem:[#allocation7 + $0xd0] sm:$0xff]
    %v204 = vld [vmem:[#allocation7 + $0xd8] sm:$0xff]
    %v205 = vld [vmem:[#allocation7 + $0xe0] sm:$0xff]
    %v206 = vld [vmem:[#allocation7 + $0xe8] sm:$0xff]
    %v207 = vld [vmem:[#allocation7 + $0xf0] sm:$0xff]
    %v208 = vld [vmem:[#allocation7 + $0xf8] sm:$0xff]
    %v209 = vld [vmem:[#allocation7 + $0x100] sm:$0xff]
    %v210 = vld [vmem:[#allocation7 + $0x108] sm:$0xff]
    %v211 = vld [vmem:[#allocation7 + $0x110] sm:$0xff]
    %v212 = vld [vmem:[#allocation7 + $0x118] sm:$0xff]
    %v213 = vld [vmem:[#allocation7 + $0x120] sm:$0xff]
    %v214 = vld [vmem:[#allocation7 + $0x128] sm:$0xff]
    %v215 = vld [vmem:[#allocation7 + $0x130] sm:$0xff]
    %v216 = vld [vmem:[#allocation7 + $0x138] sm:$0xff]
    %v217 = vld [vmem:[#allocation7 + $0x140] sm:$0xff]
    %v218 = vld [vmem:[#allocation7 + $0x148] sm:$0xff]
    %v219 = vld [vmem:[#allocation7 + $0x150] sm:$0xff]
    %v220 = vld [vmem:[#allocation7 + $0x158] sm:$0xff]
    %v221 = vld [vmem:[#allocation7 + $0x160] sm:$0xff]
    %v222 = vld [vmem:[#allocation7 + $0x168] sm:$0xff]
    %v223 = vld [vmem:[#allocation7 + $0x170] sm:$0xff]
    %v224 = vld [vmem:[#allocation7 + $0x178] sm:$0xff]
    %v225 = vld [vmem:[#allocation7 + $0x180] sm:$0xff]
    %v226 = vld [vmem:[#allocation7 + $0x188] sm:$0xff]
    %v227 = vld [vmem:[#allocation7 + $0x190] sm:$0xff]
    %v228 = vld [vmem:[#allocation7 + $0x198] sm:$0xff]
    %v229 = vld [vmem:[#allocation7 + $0x1a0] sm:$0xff]
    %v230 = vld [vmem:[#allocation7 + $0x1a8] sm:$0xff]
    %v231 = vld [vmem:[#allocation7 + $0x1b0] sm:$0xff]
    %v232 = vld [vmem:[#allocation7 + $0x1b8] sm:$0xff]
    %v233 = vld [vmem:[#allocation7 + $0x1c0] sm:$0xff]
    %v234 = vld [vmem:[#allocation7 + $0x1c8] sm:$0xff]
    %v235 = vld [vmem:[#allocation7 + $0x1d0] sm:$0xff]
    %v236 = vld [vmem:[#allocation7 + $0x1d8] sm:$0xff]
    %v237 = vld [vmem:[#allocation7 + $0x1e0] sm:$0xff]
    %v238 = vld [vmem:[#allocation7 + $0x1e8] sm:$0xff]
    %v239 = vld [vmem:[#allocation7 + $0x1f0] sm:$0xff]
    %v240 = vld [vmem:[#allocation7 + $0x1f8] sm:$0xff]
    %v241 = vld [vmem:[%s4] sm:$0xf]
    %v243 = vlaneseq
    %v244 = vshrl.u32 %v243, 7
    %v245 = vsub.s32 0, %v244
    %v246 = vrot.slane %v241, %v245
    %v247 = vlaneseq
    %v248 = vshrl.u32 %v247, 7
    %v249 = vsub.s32 1, %v248
    %v250 = vrot.slane %v241, %v249
    %v251 = vlaneseq
    %v252 = vshrl.u32 %v251, 7
    %v253 = vsub.s32 2, %v252
    %v254 = vrot.slane %v241, %v253
    %v255 = vlaneseq
    %v256 = vshrl.u32 %v255, 7
    %v257 = vsub.s32 3, %v256
    %v258 = vrot.slane %v241, %v257
    %v327 = vunpack.c.l.b16 %v177
    %v328 = vunpack.c.h.b16 %v177
    %v329 = vunpack.c.l.b16 %v178
    %v330 = vunpack.c.h.b16 %v178
    %v331 = vunpack.c.l.b16 %v179
    %v332 = vunpack.c.h.b16 %v179
    %v333 = vunpack.c.l.b16 %v180
    %v334 = vunpack.c.h.b16 %v180
    %v335 = vunpack.c.l.b16 %v181
    %v336 = vunpack.c.h.b16 %v181
    %v337 = vunpack.c.l.b16 %v182
    %v338 = vunpack.c.h.b16 %v182
    %v339 = vunpack.c.l.b16 %v183
    %v340 = vunpack.c.h.b16 %v183
    %v341 = vunpack.c.l.b16 %v184
    %v342 = vunpack.c.h.b16 %v184
    %v343 = vunpack.c.l.b16 %v185
    %v344 = vunpack.c.h.b16 %v185
    %v345 = vunpack.c.l.b16 %v186
    %v346 = vunpack.c.h.b16 %v186
    %v347 = vunpack.c.l.b16 %v187
    %v348 = vunpack.c.h.b16 %v187
    %v349 = vunpack.c.l.b16 %v188
    %v350 = vunpack.c.h.b16 %v188
    %v351 = vunpack.c.l.b16 %v189
    %v352 = vunpack.c.h.b16 %v189
    %v353 = vunpack.c.l.b16 %v190
    %v354 = vunpack.c.h.b16 %v190
    %v355 = vunpack.c.l.b16 %v191
    %v356 = vunpack.c.h.b16 %v191
    %v357 = vunpack.c.l.b16 %v192
    %v358 = vunpack.c.h.b16 %v192
    %v359 = vunpack.c.l.b16 %v193
    %v360 = vunpack.c.h.b16 %v193
    %v361 = vunpack.c.l.b16 %v194
    %v362 = vunpack.c.h.b16 %v194
    %v363 = vunpack.c.l.b16 %v195
    %v364 = vunpack.c.h.b16 %v195
    %v365 = vunpack.c.l.b16 %v196
    %v366 = vunpack.c.h.b16 %v196
    %v367 = vunpack.c.l.b16 %v197
    %v368 = vunpack.c.h.b16 %v197
    %v369 = vunpack.c.l.b16 %v198
    %v370 = vunpack.c.h.b16 %v198
    %v371 = vunpack.c.l.b16 %v199
    %v372 = vunpack.c.h.b16 %v199
    %v373 = vunpack.c.l.b16 %v200
    %v374 = vunpack.c.h.b16 %v200
    %v375 = vunpack.c.l.b16 %v201
    %v376 = vunpack.c.h.b16 %v201
    %v377 = vunpack.c.l.b16 %v202
    %v378 = vunpack.c.h.b16 %v202
    %v379 = vunpack.c.l.b16 %v203
    %v380 = vunpack.c.h.b16 %v203
    %v381 = vunpack.c.l.b16 %v204
    %v382 = vunpack.c.h.b16 %v204
    %v383 = vunpack.c.l.b16 %v205
    %v384 = vunpack.c.h.b16 %v205
    %v385 = vunpack.c.l.b16 %v206
    %v386 = vunpack.c.h.b16 %v206
    %v387 = vunpack.c.l.b16 %v207
    %v388 = vunpack.c.h.b16 %v207
    %v389 = vunpack.c.l.b16 %v208
    %v390 = vunpack.c.h.b16 %v208
    %v391 = vunpack.c.l.b16 %v209
    %v392 = vunpack.c.h.b16 %v209
    %v393 = vunpack.c.l.b16 %v210
    %v394 = vunpack.c.h.b16 %v210
    %v395 = vunpack.c.l.b16 %v211
    %v396 = vunpack.c.h.b16 %v211
    %v397 = vunpack.c.l.b16 %v212
    %v398 = vunpack.c.h.b16 %v212
    %v399 = vunpack.c.l.b16 %v213
    %v400 = vunpack.c.h.b16 %v213
    %v401 = vunpack.c.l.b16 %v214
    %v402 = vunpack.c.h.b16 %v214
    %v403 = vunpack.c.l.b16 %v215
    %v404 = vunpack.c.h.b16 %v215
    %v405 = vunpack.c.l.b16 %v216
    %v406 = vunpack.c.h.b16 %v216
    %v407 = vunpack.c.l.b16 %v217
    %v408 = vunpack.c.h.b16 %v217
    %v409 = vunpack.c.l.b16 %v218
    %v410 = vunpack.c.h.b16 %v218
    %v411 = vunpack.c.l.b16 %v219
    %v412 = vunpack.c.h.b16 %v219
    %v413 = vunpack.c.l.b16 %v220
    %v414 = vunpack.c.h.b16 %v220
    %v415 = vunpack.c.l.b16 %v221
    %v416 = vunpack.c.h.b16 %v221
    %v417 = vunpack.c.l.b16 %v222
    %v418 = vunpack.c.h.b16 %v222
    %v419 = vunpack.c.l.b16 %v223
    %v420 = vunpack.c.h.b16 %v223
    %v421 = vunpack.c.l.b16 %v224
    %v422 = vunpack.c.h.b16 %v224
    %v423 = vunpack.c.l.b16 %v225
    %v424 = vunpack.c.h.b16 %v225
    %v425 = vunpack.c.l.b16 %v226
    %v426 = vunpack.c.h.b16 %v226
    %v427 = vunpack.c.l.b16 %v227
    %v428 = vunpack.c.h.b16 %v227
    %v429 = vunpack.c.l.b16 %v228
    %v430 = vunpack.c.h.b16 %v228
    %v431 = vunpack.c.l.b16 %v229
    %v432 = vunpack.c.h.b16 %v229
    %v433 = vunpack.c.l.b16 %v230
    %v434 = vunpack.c.h.b16 %v230
    %v435 = vunpack.c.l.b16 %v231
    %v436 = vunpack.c.h.b16 %v231
    %v437 = vunpack.c.l.b16 %v232
    %v438 = vunpack.c.h.b16 %v232
    %v439 = vunpack.c.l.b16 %v233
    %v440 = vunpack.c.h.b16 %v233
    %v441 = vunpack.c.l.b16 %v234
    %v442 = vunpack.c.h.b16 %v234
    %v443 = vunpack.c.l.b16 %v235
    %v444 = vunpack.c.h.b16 %v235
    %v445 = vunpack.c.l.b16 %v236
    %v446 = vunpack.c.h.b16 %v236
    %v447 = vunpack.c.l.b16 %v237
    %v448 = vunpack.c.h.b16 %v237
    %v449 = vunpack.c.l.b16 %v238
    %v450 = vunpack.c.h.b16 %v238
    %v451 = vunpack.c.l.b16 %v239
    %v452 = vunpack.c.h.b16 %v239
    %v453 = vunpack.c.l.b16 %v240
    %v454 = vunpack.c.h.b16 %v240
    %v455 = vpack.c.b16 %v331, %v327
    %v456 = vpack.c.b16 %v332, %v328
    %v457 = vpack.c.b16 %v333, %v329
    %v458 = vpack.c.b16 %v334, %v330
    %v459 = vpack.c.b16 %v339, %v335
    %v460 = vpack.c.b16 %v340, %v336
    %v461 = vpack.c.b16 %v341, %v337
    %v462 = vpack.c.b16 %v342, %v338
    %v463 = vpack.c.b16 %v347, %v343
    %v464 = vpack.c.b16 %v348, %v344
    %v465 = vpack.c.b16 %v349, %v345
    %v466 = vpack.c.b16 %v350, %v346
    %v467 = vpack.c.b16 %v355, %v351
    %v468 = vpack.c.b16 %v356, %v352
    %v469 = vpack.c.b16 %v357, %v353
    %v470 = vpack.c.b16 %v358, %v354
    %v471 = vpack.c.b16 %v363, %v359
    %v472 = vpack.c.b16 %v364, %v360
    %v473 = vpack.c.b16 %v365, %v361
    %v474 = vpack.c.b16 %v366, %v362
    %v475 = vpack.c.b16 %v371, %v367
    %v476 = vpack.c.b16 %v372, %v368
    %v477 = vpack.c.b16 %v373, %v369
    %v478 = vpack.c.b16 %v374, %v370
    %v479 = vpack.c.b16 %v379, %v375
    %v480 = vpack.c.b16 %v380, %v376
    %v481 = vpack.c.b16 %v381, %v377
    %v482 = vpack.c.b16 %v382, %v378
    %v483 = vpack.c.b16 %v387, %v383
    %v484 = vpack.c.b16 %v388, %v384
    %v485 = vpack.c.b16 %v389, %v385
    %v486 = vpack.c.b16 %v390, %v386
    %v487 = vpack.c.b16 %v395, %v391
    %v488 = vpack.c.b16 %v396, %v392
    %v489 = vpack.c.b16 %v397, %v393
    %v490 = vpack.c.b16 %v398, %v394
    %v491 = vpack.c.b16 %v403, %v399
    %v492 = vpack.c.b16 %v404, %v400
    %v493 = vpack.c.b16 %v405, %v401
    %v494 = vpack.c.b16 %v406, %v402
    %v495 = vpack.c.b16 %v411, %v407
    %v496 = vpack.c.b16 %v412, %v408
    %v497 = vpack.c.b16 %v413, %v409
    %v498 = vpack.c.b16 %v414, %v410
    %v499 = vpack.c.b16 %v419, %v415
    %v500 = vpack.c.b16 %v420, %v416
    %v501 = vpack.c.b16 %v421, %v417
    %v502 = vpack.c.b16 %v422, %v418
    %v503 = vpack.c.b16 %v427, %v423
    %v504 = vpack.c.b16 %v428, %v424
    %v505 = vpack.c.b16 %v429, %v425
    %v506 = vpack.c.b16 %v430, %v426
    %v507 = vpack.c.b16 %v435, %v431
    %v508 = vpack.c.b16 %v436, %v432
    %v509 = vpack.c.b16 %v437, %v433
    %v510 = vpack.c.b16 %v438, %v434
    %v511 = vpack.c.b16 %v443, %v439
    %v512 = vpack.c.b16 %v444, %v440
    %v513 = vpack.c.b16 %v445, %v441
    %v514 = vpack.c.b16 %v446, %v442
    %v515 = vpack.c.b16 %v451, %v447
    %v516 = vpack.c.b16 %v452, %v448
    %v517 = vpack.c.b16 %v453, %v449
    %v518 = vpack.c.b16 %v454, %v450
    %583 = vmatprep.subr.bf16.mxu0 %v456
    %584 = vmatpush1.bf16.msra.mxu0 %v455
    %585 = vmatprep.subr.bf16.mxu0 %v460
    %586 = vmatpush1.bf16.msra.mxu0 %v459
    %587 = vmatprep.subr.bf16.mxu0 %v464
    %588 = vmatpush1.bf16.msra.mxu0 %v463
    %589 = vmatprep.subr.bf16.mxu0 %v468
    %590 = vmatpush1.bf16.msra.mxu0 %v467
    %591 = vmatprep.subr.bf16.mxu0 %v472
    %592 = vmatpush1.bf16.msra.mxu0 %v471
    %593 = vmatprep.subr.bf16.mxu0 %v476
    %594 = vmatpush1.bf16.msra.mxu0 %v475
    %595 = vmatprep.subr.bf16.mxu0 %v480
    %596 = vmatpush1.bf16.msra.mxu0 %v479
    %597 = vmatprep.subr.bf16.mxu0 %v484
    %598 = vmatpush1.bf16.msra.mxu0 %v483
    %599 = vmatprep.subr.bf16.mxu0 %v488
    %600 = vmatpush1.bf16.msra.mxu0 %v487
    %601 = vmatprep.subr.bf16.mxu0 %v492
    %602 = vmatpush1.bf16.msra.mxu0 %v491
    %603 = vmatprep.subr.bf16.mxu0 %v496
    %604 = vmatpush1.bf16.msra.mxu0 %v495
    %605 = vmatprep.subr.bf16.mxu0 %v500
    %606 = vmatpush1.bf16.msra.mxu0 %v499
    %607 = vmatprep.subr.bf16.mxu0 %v504
    %608 = vmatpush1.bf16.msra.mxu0 %v503
    %609 = vmatprep.subr.bf16.mxu0 %v508
    %610 = vmatpush1.bf16.msra.mxu0 %v507
    %611 = vmatprep.subr.bf16.mxu0 %v512
    %612 = vmatpush1.bf16.msra.mxu0 %v511
    %613 = vmatprep.subr.bf16.mxu0 %v516
    %614 = vmatpush1.bf16.msra.mxu0 %v515
    %615 = vmatprep.mubr.bf16.mxu0 %v176
    %616 = vmatmul.mubr.bf16.gmra.mrb[0].mxu0 %v175
    %v617 = vpop.f32.mrb[0].mxu0
    %v618 = vadd.f32 %v246, %v617
    %v619 = vpop.f32.mrb[0].mxu0
    %v620 = vadd.f32 %v250, %v619
    %v621 = vpop.f32.mrb[0].mxu0
    %v622 = vpop.f32.mrb[0].mxu0
    %623 = vdwg.mxu0
    %624 = vmatprep.subr.bf16.mxu0 %v458
    %625 = vmatpush1.bf16.msra.mxu0 %v457
    %626 = vmatprep.subr.bf16.mxu0 %v462
    %627 = vmatpush1.bf16.msra.mxu0 %v461
    %628 = vmatprep.subr.bf16.mxu0 %v466
    %629 = vmatpush1.bf16.msra.mxu0 %v465
    %630 = vmatprep.subr.bf16.mxu0 %v470
    %631 = vmatpush1.bf16.msra.mxu0 %v469
    %632 = vmatprep.subr.bf16.mxu0 %v474
    %633 = vmatpush1.bf16.msra.mxu0 %v473
    %634 = vmatprep.subr.bf16.mxu0 %v478
    %635 = vmatpush1.bf16.msra.mxu0 %v477
    %636 = vmatprep.subr.bf16.mxu0 %v482
    %637 = vmatpush1.bf16.msra.mxu0 %v481
    %638 = vmatprep.subr.bf16.mxu0 %v486
    %639 = vmatpush1.bf16.msra.mxu0 %v485
    %640 = vmatprep.subr.bf16.mxu0 %v490
    %641 = vmatpush1.bf16.msra.mxu0 %v489
    %642 = vmatprep.subr.bf16.mxu0 %v494
    %643 = vmatpush1.bf16.msra.mxu0 %v493
    %644 = vmatprep.subr.bf16.mxu0 %v498
    %645 = vmatpush1.bf16.msra.mxu0 %v497
    %646 = vmatprep.subr.bf16.mxu0 %v502
    %647 = vmatpush1.bf16.msra.mxu0 %v501
    %648 = vmatprep.subr.bf16.mxu0 %v506
    %649 = vmatpush1.bf16.msra.mxu0 %v505
    %650 = vmatprep.subr.bf16.mxu0 %v510
    %651 = vmatpush1.bf16.msra.mxu0 %v509
    %652 = vmatprep.subr.bf16.mxu0 %v514
    %653 = vmatpush1.bf16.msra.mxu0 %v513
    %654 = vmatprep.subr.bf16.mxu0 %v518
    %655 = vmatpush1.bf16.msra.mxu0 %v517
    %656 = vmatprep.mubr.bf16.mxu0 %v176
    %657 = vmatmul.mubr.bf16.gmra.mrb[0].mxu0 %v175
    %v658 = vpop.f32.mrb[0].mxu0
    %v659 = vadd.f32 %v254, %v658
    %v660 = vpop.f32.mrb[0].mxu0
    %v661 = vadd.f32 %v258, %v660
    %v662 = vpop.f32.mrb[0].mxu0
    %v663 = vpop.f32.mrb[0].mxu0
    %664 = vdwg.mxu0
    %v665 = vpack.c.bf16 %v618, %v618
    %v666 = vpack.c.bf16 %v620, %v620
    %v667 = vpack.c.bf16 %v659, %v659
    %v668 = vpack.c.bf16 %v661, %v661
    %v669 = vmax.bf16 %v665, 0
    %v670 = vmax.bf16 %v666, 0
    %v671 = vmax.bf16 %v667, 0
    %v672 = vmax.bf16 %v668, 0
    %v673 = vld [vmem:[#allocation8] sm:$0xff]
    %v674 = vld [vmem:[#allocation8 + $0x8] sm:$0xff]
    %v675 = vld [vmem:[#allocation8 + $0x10] sm:$0xff]
    %v676 = vld [vmem:[#allocation8 + $0x18] sm:$0xff]
    %v677 = vld [vmem:[#allocation8 + $0x20] sm:$0xff]
    %v678 = vld [vmem:[#allocation8 + $0x28] sm:$0xff]
    %v679 = vld [vmem:[#allocation8 + $0x30] sm:$0xff]
    %v680 = vld [vmem:[#allocation8 + $0x38] sm:$0xff]
    %v681 = vld [vmem:[#allocation8 + $0x40] sm:$0xff]
    %v682 = vld [vmem:[#allocation8 + $0x48] sm:$0xff]
    %v683 = vld [vmem:[#allocation8 + $0x50] sm:$0xff]
    %v684 = vld [vmem:[#allocation8 + $0x58] sm:$0xff]
    %v685 = vld [vmem:[#allocation8 + $0x60] sm:$0xff]
    %v686 = vld [vmem:[#allocation8 + $0x68] sm:$0xff]
    %v687 = vld [vmem:[#allocation8 + $0x70] sm:$0xff]
    %v688 = vld [vmem:[#allocation8 + $0x78] sm:$0xff]
    %v689 = vld [vmem:[#allocation8 + $0x80] sm:$0xff]
    %v690 = vld [vmem:[#allocation8 + $0x88] sm:$0xff]
    %v691 = vld [vmem:[#allocation8 + $0x90] sm:$0xff]
    %v692 = vld [vmem:[#allocation8 + $0x98] sm:$0xff]
    %v693 = vld [vmem:[#allocation8 + $0xa0] sm:$0xff]
    %v694 = vld [vmem:[#allocation8 + $0xa8] sm:$0xff]
    %v695 = vld [vmem:[#allocation8 + $0xb0] sm:$0xff]
    %v696 = vld [vmem:[#allocation8 + $0xb8] sm:$0xff]
    %v697 = vld [vmem:[#allocation8 + $0xc0] sm:$0xff]
    %v698 = vld [vmem:[#allocation8 + $0xc8] sm:$0xff]
    %v699 = vld [vmem:[#allocation8 + $0xd0] sm:$0xff]
    %v700 = vld [vmem:[#allocation8 + $0xd8] sm:$0xff]
    %v701 = vld [vmem:[#allocation8 + $0xe0] sm:$0xff]
    %v702 = vld [vmem:[#allocation8 + $0xe8] sm:$0xff]
    %v703 = vld [vmem:[#allocation8 + $0xf0] sm:$0xff]
    %v704 = vld [vmem:[#allocation8 + $0xf8] sm:$0xff]
    %v705 = vld [vmem:[#allocation8 + $0x100] sm:$0xff]
    %v706 = vld [vmem:[#allocation8 + $0x108] sm:$0xff]
    %v707 = vld [vmem:[#allocation8 + $0x110] sm:$0xff]
    %v708 = vld [vmem:[#allocation8 + $0x118] sm:$0xff]
    %v709 = vld [vmem:[#allocation8 + $0x120] sm:$0xff]
    %v710 = vld [vmem:[#allocation8 + $0x128] sm:$0xff]
    %v711 = vld [vmem:[#allocation8 + $0x130] sm:$0xff]
    %v712 = vld [vmem:[#allocation8 + $0x138] sm:$0xff]
    %v713 = vld [vmem:[#allocation8 + $0x140] sm:$0xff]
    %v714 = vld [vmem:[#allocation8 + $0x148] sm:$0xff]
    %v715 = vld [vmem:[#allocation8 + $0x150] sm:$0xff]
    %v716 = vld [vmem:[#allocation8 + $0x158] sm:$0xff]
    %v717 = vld [vmem:[#allocation8 + $0x160] sm:$0xff]
    %v718 = vld [vmem:[#allocation8 + $0x168] sm:$0xff]
    %v719 = vld [vmem:[#allocation8 + $0x170] sm:$0xff]
    %v720 = vld [vmem:[#allocation8 + $0x178] sm:$0xff]
    %v721 = vld [vmem:[#allocation8 + $0x180] sm:$0xff]
    %v722 = vld [vmem:[#allocation8 + $0x188] sm:$0xff]
    %v723 = vld [vmem:[#allocation8 + $0x190] sm:$0xff]
    %v724 = vld [vmem:[#allocation8 + $0x198] sm:$0xff]
    %v725 = vld [vmem:[#allocation8 + $0x1a0] sm:$0xff]
    %v726 = vld [vmem:[#allocation8 + $0x1a8] sm:$0xff]
    %v727 = vld [vmem:[#allocation8 + $0x1b0] sm:$0xff]
    %v728 = vld [vmem:[#allocation8 + $0x1b8] sm:$0xff]
    %v729 = vld [vmem:[#allocation8 + $0x1c0] sm:$0xff]
    %v730 = vld [vmem:[#allocation8 + $0x1c8] sm:$0xff]
    %v731 = vld [vmem:[#allocation8 + $0x1d0] sm:$0xff]
    %v732 = vld [vmem:[#allocation8 + $0x1d8] sm:$0xff]
    %v733 = vld [vmem:[#allocation8 + $0x1e0] sm:$0xff]
    %v734 = vld [vmem:[#allocation8 + $0x1e8] sm:$0xff]
    %v735 = vld [vmem:[#allocation8 + $0x1f0] sm:$0xff]
    %v736 = vld [vmem:[#allocation8 + $0x1f8] sm:$0xff]
    %v737 = vld [vmem:[#allocation8 + $0x200] sm:$0xff]
    %v738 = vld [vmem:[#allocation8 + $0x208] sm:$0xff]
    %v739 = vld [vmem:[#allocation8 + $0x210] sm:$0xff]
    %v740 = vld [vmem:[#allocation8 + $0x218] sm:$0xff]
    %v741 = vld [vmem:[#allocation8 + $0x220] sm:$0xff]
    %v742 = vld [vmem:[#allocation8 + $0x228] sm:$0xff]
    %v743 = vld [vmem:[#allocation8 + $0x230] sm:$0xff]
    %v744 = vld [vmem:[#allocation8 + $0x238] sm:$0xff]
    %v745 = vld [vmem:[#allocation8 + $0x240] sm:$0xff]
    %v746 = vld [vmem:[#allocation8 + $0x248] sm:$0xff]
    %v747 = vld [vmem:[#allocation8 + $0x250] sm:$0xff]
    %v748 = vld [vmem:[#allocation8 + $0x258] sm:$0xff]
    %v749 = vld [vmem:[#allocation8 + $0x260] sm:$0xff]
    %v750 = vld [vmem:[#allocation8 + $0x268] sm:$0xff]
    %v751 = vld [vmem:[#allocation8 + $0x270] sm:$0xff]
    %v752 = vld [vmem:[#allocation8 + $0x278] sm:$0xff]
    %v753 = vld [vmem:[#allocation8 + $0x280] sm:$0xff]
    %v754 = vld [vmem:[#allocation8 + $0x288] sm:$0xff]
    %v755 = vld [vmem:[#allocation8 + $0x290] sm:$0xff]
    %v756 = vld [vmem:[#allocation8 + $0x298] sm:$0xff]
    %v757 = vld [vmem:[#allocation8 + $0x2a0] sm:$0xff]
    %v758 = vld [vmem:[#allocation8 + $0x2a8] sm:$0xff]
    %v759 = vld [vmem:[#allocation8 + $0x2b0] sm:$0xff]
    %v760 = vld [vmem:[#allocation8 + $0x2b8] sm:$0xff]
    %v761 = vld [vmem:[#allocation8 + $0x2c0] sm:$0xff]
    %v762 = vld [vmem:[#allocation8 + $0x2c8] sm:$0xff]
    %v763 = vld [vmem:[#allocation8 + $0x2d0] sm:$0xff]
    %v764 = vld [vmem:[#allocation8 + $0x2d8] sm:$0xff]
    %v765 = vld [vmem:[#allocation8 + $0x2e0] sm:$0xff]
    %v766 = vld [vmem:[#allocation8 + $0x2e8] sm:$0xff]
    %v767 = vld [vmem:[#allocation8 + $0x2f0] sm:$0xff]
    %v768 = vld [vmem:[#allocation8 + $0x2f8] sm:$0xff]
    %v769 = vld [vmem:[#allocation8 + $0x300] sm:$0xff]
    %v770 = vld [vmem:[#allocation8 + $0x308] sm:$0xff]
    %v771 = vld [vmem:[#allocation8 + $0x310] sm:$0xff]
    %v772 = vld [vmem:[#allocation8 + $0x318] sm:$0xff]
    %v773 = vld [vmem:[#allocation8 + $0x320] sm:$0xff]
    %v774 = vld [vmem:[#allocation8 + $0x328] sm:$0xff]
    %v775 = vld [vmem:[#allocation8 + $0x330] sm:$0xff]
    %v776 = vld [vmem:[#allocation8 + $0x338] sm:$0xff]
    %v777 = vld [vmem:[#allocation8 + $0x340] sm:$0xff]
    %v778 = vld [vmem:[#allocation8 + $0x348] sm:$0xff]
    %v779 = vld [vmem:[#allocation8 + $0x350] sm:$0xff]
    %v780 = vld [vmem:[#allocation8 + $0x358] sm:$0xff]
    %v781 = vld [vmem:[#allocation8 + $0x360] sm:$0xff]
    %v782 = vld [vmem:[#allocation8 + $0x368] sm:$0xff]
    %v783 = vld [vmem:[#allocation8 + $0x370] sm:$0xff]
    %v784 = vld [vmem:[#allocation8 + $0x378] sm:$0xff]
    %v785 = vld [vmem:[#allocation8 + $0x380] sm:$0xff]
    %v786 = vld [vmem:[#allocation8 + $0x388] sm:$0xff]
    %v787 = vld [vmem:[#allocation8 + $0x390] sm:$0xff]
    %v788 = vld [vmem:[#allocation8 + $0x398] sm:$0xff]
    %v789 = vld [vmem:[#allocation8 + $0x3a0] sm:$0xff]
    %v790 = vld [vmem:[#allocation8 + $0x3a8] sm:$0xff]
    %v791 = vld [vmem:[#allocation8 + $0x3b0] sm:$0xff]
    %v792 = vld [vmem:[#allocation8 + $0x3b8] sm:$0xff]
    %v793 = vld [vmem:[#allocation8 + $0x3c0] sm:$0xff]
    %v794 = vld [vmem:[#allocation8 + $0x3c8] sm:$0xff]
    %v795 = vld [vmem:[#allocation8 + $0x3d0] sm:$0xff]
    %v796 = vld [vmem:[#allocation8 + $0x3d8] sm:$0xff]
    %v797 = vld [vmem:[#allocation8 + $0x3e0] sm:$0xff]
    %v798 = vld [vmem:[#allocation8 + $0x3e8] sm:$0xff]
    %v799 = vld [vmem:[#allocation8 + $0x3f0] sm:$0xff]
    %v800 = vld [vmem:[#allocation8 + $0x3f8] sm:$0xff]
    %v801 = vld [vmem:[%s6] sm:$0xf]
    %v803 = vlaneseq
    %v804 = vshrl.u32 %v803, 7
    %v805 = vsub.s32 0, %v804
    %v806 = vrot.slane %v801, %v805
    %v807 = vlaneseq
    %v808 = vshrl.u32 %v807, 7
    %v809 = vsub.s32 1, %v808
    %v810 = vrot.slane %v801, %v809
    %v811 = vlaneseq
    %v812 = vshrl.u32 %v811, 7
    %v813 = vsub.s32 2, %v812
    %v814 = vrot.slane %v801, %v813
    %v815 = vlaneseq
    %v816 = vshrl.u32 %v815, 7
    %v817 = vsub.s32 3, %v816
    %v818 = vrot.slane %v801, %v817
    %v951 = vunpack.c.l.b16 %v673
    %v952 = vunpack.c.h.b16 %v673
    %v953 = vunpack.c.l.b16 %v674
    %v954 = vunpack.c.h.b16 %v674
    %v955 = vunpack.c.l.b16 %v675
    %v956 = vunpack.c.h.b16 %v675
    %v957 = vunpack.c.l.b16 %v676
    %v958 = vunpack.c.h.b16 %v676
    %v959 = vunpack.c.l.b16 %v677
    %v960 = vunpack.c.h.b16 %v677
    %v961 = vunpack.c.l.b16 %v678
    %v962 = vunpack.c.h.b16 %v678
    %v963 = vunpack.c.l.b16 %v679
    %v964 = vunpack.c.h.b16 %v679
    %v965 = vunpack.c.l.b16 %v680
    %v966 = vunpack.c.h.b16 %v680
    %v967 = vunpack.c.l.b16 %v681
    %v968 = vunpack.c.h.b16 %v681
    %v969 = vunpack.c.l.b16 %v682
    %v970 = vunpack.c.h.b16 %v682
    %v971 = vunpack.c.l.b16 %v683
    %v972 = vunpack.c.h.b16 %v683
    %v973 = vunpack.c.l.b16 %v684
    %v974 = vunpack.c.h.b16 %v684
    %v975 = vunpack.c.l.b16 %v685
    %v976 = vunpack.c.h.b16 %v685
    %v977 = vunpack.c.l.b16 %v686
    %v978 = vunpack.c.h.b16 %v686
    %v979 = vunpack.c.l.b16 %v687
    %v980 = vunpack.c.h.b16 %v687
    %v981 = vunpack.c.l.b16 %v688
    %v982 = vunpack.c.h.b16 %v688
    %v983 = vunpack.c.l.b16 %v689
    %v984 = vunpack.c.h.b16 %v689
    %v985 = vunpack.c.l.b16 %v690
    %v986 = vunpack.c.h.b16 %v690
    %v987 = vunpack.c.l.b16 %v691
    %v988 = vunpack.c.h.b16 %v691
    %v989 = vunpack.c.l.b16 %v692
    %v990 = vunpack.c.h.b16 %v692
    %v991 = vunpack.c.l.b16 %v693
    %v992 = vunpack.c.h.b16 %v693
    %v993 = vunpack.c.l.b16 %v694
    %v994 = vunpack.c.h.b16 %v694
    %v995 = vunpack.c.l.b16 %v695
    %v996 = vunpack.c.h.b16 %v695
    %v997 = vunpack.c.l.b16 %v696
    %v998 = vunpack.c.h.b16 %v696
    %v999 = vunpack.c.l.b16 %v697
    %v1000 = vunpack.c.h.b16 %v697
    %v1001 = vunpack.c.l.b16 %v698
    %v1002 = vunpack.c.h.b16 %v698
    %v1003 = vunpack.c.l.b16 %v699
    %v1004 = vunpack.c.h.b16 %v699
    %v1005 = vunpack.c.l.b16 %v700
    %v1006 = vunpack.c.h.b16 %v700
    %v1007 = vunpack.c.l.b16 %v701
    %v1008 = vunpack.c.h.b16 %v701
    %v1009 = vunpack.c.l.b16 %v702
    %v1010 = vunpack.c.h.b16 %v702
    %v1011 = vunpack.c.l.b16 %v703
    %v1012 = vunpack.c.h.b16 %v703
    %v1013 = vunpack.c.l.b16 %v704
    %v1014 = vunpack.c.h.b16 %v704
    %v1015 = vunpack.c.l.b16 %v705
    %v1016 = vunpack.c.h.b16 %v705
    %v1017 = vunpack.c.l.b16 %v706
    %v1018 = vunpack.c.h.b16 %v706
    %v1019 = vunpack.c.l.b16 %v707
    %v1020 = vunpack.c.h.b16 %v707
    %v1021 = vunpack.c.l.b16 %v708
    %v1022 = vunpack.c.h.b16 %v708
    %v1023 = vunpack.c.l.b16 %v709
    %v1024 = vunpack.c.h.b16 %v709
    %v1025 = vunpack.c.l.b16 %v710
    %v1026 = vunpack.c.h.b16 %v710
    %v1027 = vunpack.c.l.b16 %v711
    %v1028 = vunpack.c.h.b16 %v711
    %v1029 = vunpack.c.l.b16 %v712
    %v1030 = vunpack.c.h.b16 %v712
    %v1031 = vunpack.c.l.b16 %v713
    %v1032 = vunpack.c.h.b16 %v713
    %v1033 = vunpack.c.l.b16 %v714
    %v1034 = vunpack.c.h.b16 %v714
    %v1035 = vunpack.c.l.b16 %v715
    %v1036 = vunpack.c.h.b16 %v715
    %v1037 = vunpack.c.l.b16 %v716
    %v1038 = vunpack.c.h.b16 %v716
    %v1039 = vunpack.c.l.b16 %v717
    %v1040 = vunpack.c.h.b16 %v717
    %v1041 = vunpack.c.l.b16 %v718
    %v1042 = vunpack.c.h.b16 %v718
    %v1043 = vunpack.c.l.b16 %v719
    %v1044 = vunpack.c.h.b16 %v719
    %v1045 = vunpack.c.l.b16 %v720
    %v1046 = vunpack.c.h.b16 %v720
    %v1047 = vunpack.c.l.b16 %v721
    %v1048 = vunpack.c.h.b16 %v721
    %v1049 = vunpack.c.l.b16 %v722
    %v1050 = vunpack.c.h.b16 %v722
    %v1051 = vunpack.c.l.b16 %v723
    %v1052 = vunpack.c.h.b16 %v723
    %v1053 = vunpack.c.l.b16 %v724
    %v1054 = vunpack.c.h.b16 %v724
    %v1055 = vunpack.c.l.b16 %v725
    %v1056 = vunpack.c.h.b16 %v725
    %v1057 = vunpack.c.l.b16 %v726
    %v1058 = vunpack.c.h.b16 %v726
    %v1059 = vunpack.c.l.b16 %v727
    %v1060 = vunpack.c.h.b16 %v727
    %v1061 = vunpack.c.l.b16 %v728
    %v1062 = vunpack.c.h.b16 %v728
    %v1063 = vunpack.c.l.b16 %v729
    %v1064 = vunpack.c.h.b16 %v729
    %v1065 = vunpack.c.l.b16 %v730
    %v1066 = vunpack.c.h.b16 %v730
    %v1067 = vunpack.c.l.b16 %v731
    %v1068 = vunpack.c.h.b16 %v731
    %v1069 = vunpack.c.l.b16 %v732
    %v1070 = vunpack.c.h.b16 %v732
    %v1071 = vunpack.c.l.b16 %v733
    %v1072 = vunpack.c.h.b16 %v733
    %v1073 = vunpack.c.l.b16 %v734
    %v1074 = vunpack.c.h.b16 %v734
    %v1075 = vunpack.c.l.b16 %v735
    %v1076 = vunpack.c.h.b16 %v735
    %v1077 = vunpack.c.l.b16 %v736
    %v1078 = vunpack.c.h.b16 %v736
    %v1079 = vunpack.c.l.b16 %v737
    %v1080 = vunpack.c.h.b16 %v737
    %v1081 = vunpack.c.l.b16 %v738
    %v1082 = vunpack.c.h.b16 %v738
    %v1083 = vunpack.c.l.b16 %v739
    %v1084 = vunpack.c.h.b16 %v739
    %v1085 = vunpack.c.l.b16 %v740
    %v1086 = vunpack.c.h.b16 %v740
    %v1087 = vunpack.c.l.b16 %v741
    %v1088 = vunpack.c.h.b16 %v741
    %v1089 = vunpack.c.l.b16 %v742
    %v1090 = vunpack.c.h.b16 %v742
    %v1091 = vunpack.c.l.b16 %v743
    %v1092 = vunpack.c.h.b16 %v743
    %v1093 = vunpack.c.l.b16 %v744
    %v1094 = vunpack.c.h.b16 %v744
    %v1095 = vunpack.c.l.b16 %v745
    %v1096 = vunpack.c.h.b16 %v745
    %v1097 = vunpack.c.l.b16 %v746
    %v1098 = vunpack.c.h.b16 %v746
    %v1099 = vunpack.c.l.b16 %v747
    %v1100 = vunpack.c.h.b16 %v747
    %v1101 = vunpack.c.l.b16 %v748
    %v1102 = vunpack.c.h.b16 %v748
    %v1103 = vunpack.c.l.b16 %v749
    %v1104 = vunpack.c.h.b16 %v749
    %v1105 = vunpack.c.l.b16 %v750
    %v1106 = vunpack.c.h.b16 %v750
    %v1107 = vunpack.c.l.b16 %v751
    %v1108 = vunpack.c.h.b16 %v751
    %v1109 = vunpack.c.l.b16 %v752
    %v1110 = vunpack.c.h.b16 %v752
    %v1111 = vunpack.c.l.b16 %v753
    %v1112 = vunpack.c.h.b16 %v753
    %v1113 = vunpack.c.l.b16 %v754
    %v1114 = vunpack.c.h.b16 %v754
    %v1115 = vunpack.c.l.b16 %v755
    %v1116 = vunpack.c.h.b16 %v755
    %v1117 = vunpack.c.l.b16 %v756
    %v1118 = vunpack.c.h.b16 %v756
    %v1119 = vunpack.c.l.b16 %v757
    %v1120 = vunpack.c.h.b16 %v757
    %v1121 = vunpack.c.l.b16 %v758
    %v1122 = vunpack.c.h.b16 %v758
    %v1123 = vunpack.c.l.b16 %v759
    %v1124 = vunpack.c.h.b16 %v759
    %v1125 = vunpack.c.l.b16 %v760
    %v1126 = vunpack.c.h.b16 %v760
    %v1127 = vunpack.c.l.b16 %v761
    %v1128 = vunpack.c.h.b16 %v761
    %v1129 = vunpack.c.l.b16 %v762
    %v1130 = vunpack.c.h.b16 %v762
    %v1131 = vunpack.c.l.b16 %v763
    %v1132 = vunpack.c.h.b16 %v763
    %v1133 = vunpack.c.l.b16 %v764
    %v1134 = vunpack.c.h.b16 %v764
    %v1135 = vunpack.c.l.b16 %v765
    %v1136 = vunpack.c.h.b16 %v765
    %v1137 = vunpack.c.l.b16 %v766
    %v1138 = vunpack.c.h.b16 %v766
    %v1139 = vunpack.c.l.b16 %v767
    %v1140 = vunpack.c.h.b16 %v767
    %v1141 = vunpack.c.l.b16 %v768
    %v1142 = vunpack.c.h.b16 %v768
    %v1143 = vunpack.c.l.b16 %v769
    %v1144 = vunpack.c.h.b16 %v769
    %v1145 = vunpack.c.l.b16 %v770
    %v1146 = vunpack.c.h.b16 %v770
    %v1147 = vunpack.c.l.b16 %v771
    %v1148 = vunpack.c.h.b16 %v771
    %v1149 = vunpack.c.l.b16 %v772
    %v1150 = vunpack.c.h.b16 %v772
    %v1151 = vunpack.c.l.b16 %v773
    %v1152 = vunpack.c.h.b16 %v773
    %v1153 = vunpack.c.l.b16 %v774
    %v1154 = vunpack.c.h.b16 %v774
    %v1155 = vunpack.c.l.b16 %v775
    %v1156 = vunpack.c.h.b16 %v775
    %v1157 = vunpack.c.l.b16 %v776
    %v1158 = vunpack.c.h.b16 %v776
    %v1159 = vunpack.c.l.b16 %v777
    %v1160 = vunpack.c.h.b16 %v777
    %v1161 = vunpack.c.l.b16 %v778
    %v1162 = vunpack.c.h.b16 %v778
    %v1163 = vunpack.c.l.b16 %v779
    %v1164 = vunpack.c.h.b16 %v779
    %v1165 = vunpack.c.l.b16 %v780
    %v1166 = vunpack.c.h.b16 %v780
    %v1167 = vunpack.c.l.b16 %v781
    %v1168 = vunpack.c.h.b16 %v781
    %v1169 = vunpack.c.l.b16 %v782
    %v1170 = vunpack.c.h.b16 %v782
    %v1171 = vunpack.c.l.b16 %v783
    %v1172 = vunpack.c.h.b16 %v783
    %v1173 = vunpack.c.l.b16 %v784
    %v1174 = vunpack.c.h.b16 %v784
    %v1175 = vunpack.c.l.b16 %v785
    %v1176 = vunpack.c.h.b16 %v785
    %v1177 = vunpack.c.l.b16 %v786
    %v1178 = vunpack.c.h.b16 %v786
    %v1179 = vunpack.c.l.b16 %v787
    %v1180 = vunpack.c.h.b16 %v787
    %v1181 = vunpack.c.l.b16 %v788
    %v1182 = vunpack.c.h.b16 %v788
    %v1183 = vunpack.c.l.b16 %v789
    %v1184 = vunpack.c.h.b16 %v789
    %v1185 = vunpack.c.l.b16 %v790
    %v1186 = vunpack.c.h.b16 %v790
    %v1187 = vunpack.c.l.b16 %v791
    %v1188 = vunpack.c.h.b16 %v791
    %v1189 = vunpack.c.l.b16 %v792
    %v1190 = vunpack.c.h.b16 %v792
    %v1191 = vunpack.c.l.b16 %v793
    %v1192 = vunpack.c.h.b16 %v793
    %v1193 = vunpack.c.l.b16 %v794
    %v1194 = vunpack.c.h.b16 %v794
    %v1195 = vunpack.c.l.b16 %v795
    %v1196 = vunpack.c.h.b16 %v795
    %v1197 = vunpack.c.l.b16 %v796
    %v1198 = vunpack.c.h.b16 %v796
    %v1199 = vunpack.c.l.b16 %v797
    %v1200 = vunpack.c.h.b16 %v797
    %v1201 = vunpack.c.l.b16 %v798
    %v1202 = vunpack.c.h.b16 %v798
    %v1203 = vunpack.c.l.b16 %v799
    %v1204 = vunpack.c.h.b16 %v799
    %v1205 = vunpack.c.l.b16 %v800
    %v1206 = vunpack.c.h.b16 %v800
    %v1207 = vpack.c.b16 %v955, %v951
    %v1208 = vpack.c.b16 %v956, %v952
    %v1209 = vpack.c.b16 %v957, %v953
    %v1210 = vpack.c.b16 %v958, %v954
    %v1211 = vpack.c.b16 %v963, %v959
    %v1212 = vpack.c.b16 %v964, %v960
    %v1213 = vpack.c.b16 %v965, %v961
    %v1214 = vpack.c.b16 %v966, %v962
    %v1215 = vpack.c.b16 %v971, %v967
    %v1216 = vpack.c.b16 %v972, %v968
    %v1217 = vpack.c.b16 %v973, %v969
    %v1218 = vpack.c.b16 %v974, %v970
    %v1219 = vpack.c.b16 %v979, %v975
    %v1220 = vpack.c.b16 %v980, %v976
    %v1221 = vpack.c.b16 %v981, %v977
    %v1222 = vpack.c.b16 %v982, %v978
    %v1223 = vpack.c.b16 %v987, %v983
    %v1224 = vpack.c.b16 %v988, %v984
    %v1225 = vpack.c.b16 %v989, %v985
    %v1226 = vpack.c.b16 %v990, %v986
    %v1227 = vpack.c.b16 %v995, %v991
    %v1228 = vpack.c.b16 %v996, %v992
    %v1229 = vpack.c.b16 %v997, %v993
    %v1230 = vpack.c.b16 %v998, %v994
    %v1231 = vpack.c.b16 %v1003, %v999
    %v1232 = vpack.c.b16 %v1004, %v1000
    %v1233 = vpack.c.b16 %v1005, %v1001
    %v1234 = vpack.c.b16 %v1006, %v1002
    %v1235 = vpack.c.b16 %v1011, %v1007
    %v1236 = vpack.c.b16 %v1012, %v1008
    %v1237 = vpack.c.b16 %v1013, %v1009
    %v1238 = vpack.c.b16 %v1014, %v1010
    %v1239 = vpack.c.b16 %v1019, %v1015
    %v1240 = vpack.c.b16 %v1020, %v1016
    %v1241 = vpack.c.b16 %v1021, %v1017
    %v1242 = vpack.c.b16 %v1022, %v1018
    %v1243 = vpack.c.b16 %v1027, %v1023
    %v1244 = vpack.c.b16 %v1028, %v1024
    %v1245 = vpack.c.b16 %v1029, %v1025
    %v1246 = vpack.c.b16 %v1030, %v1026
    %v1247 = vpack.c.b16 %v1035, %v1031
    %v1248 = vpack.c.b16 %v1036, %v1032
    %v1249 = vpack.c.b16 %v1037, %v1033
    %v1250 = vpack.c.b16 %v1038, %v1034
    %v1251 = vpack.c.b16 %v1043, %v1039
    %v1252 = vpack.c.b16 %v1044, %v1040
    %v1253 = vpack.c.b16 %v1045, %v1041
    %v1254 = vpack.c.b16 %v1046, %v1042
    %v1255 = vpack.c.b16 %v1051, %v1047
    %v1256 = vpack.c.b16 %v1052, %v1048
    %v1257 = vpack.c.b16 %v1053, %v1049
    %v1258 = vpack.c.b16 %v1054, %v1050
    %v1259 = vpack.c.b16 %v1059, %v1055
    %v1260 = vpack.c.b16 %v1060, %v1056
    %v1261 = vpack.c.b16 %v1061, %v1057
    %v1262 = vpack.c.b16 %v1062, %v1058
    %v1263 = vpack.c.b16 %v1067, %v1063
    %v1264 = vpack.c.b16 %v1068, %v1064
    %v1265 = vpack.c.b16 %v1069, %v1065
    %v1266 = vpack.c.b16 %v1070, %v1066
    %v1267 = vpack.c.b16 %v1075, %v1071
    %v1268 = vpack.c.b16 %v1076, %v1072
    %v1269 = vpack.c.b16 %v1077, %v1073
    %v1270 = vpack.c.b16 %v1078, %v1074
    %v1271 = vpack.c.b16 %v1083, %v1079
    %v1272 = vpack.c.b16 %v1084, %v1080
    %v1273 = vpack.c.b16 %v1085, %v1081
    %v1274 = vpack.c.b16 %v1086, %v1082
    %v1275 = vpack.c.b16 %v1091, %v1087
    %v1276 = vpack.c.b16 %v1092, %v1088
    %v1277 = vpack.c.b16 %v1093, %v1089
    %v1278 = vpack.c.b16 %v1094, %v1090
    %v1279 = vpack.c.b16 %v1099, %v1095
    %v1280 = vpack.c.b16 %v1100, %v1096
    %v1281 = vpack.c.b16 %v1101, %v1097
    %v1282 = vpack.c.b16 %v1102, %v1098
    %v1283 = vpack.c.b16 %v1107, %v1103
    %v1284 = vpack.c.b16 %v1108, %v1104
    %v1285 = vpack.c.b16 %v1109, %v1105
    %v1286 = vpack.c.b16 %v1110, %v1106
    %v1287 = vpack.c.b16 %v1115, %v1111
    %v1288 = vpack.c.b16 %v1116, %v1112
    %v1289 = vpack.c.b16 %v1117, %v1113
    %v1290 = vpack.c.b16 %v1118, %v1114
    %v1291 = vpack.c.b16 %v1123, %v1119
    %v1292 = vpack.c.b16 %v1124, %v1120
    %v1293 = vpack.c.b16 %v1125, %v1121
    %v1294 = vpack.c.b16 %v1126, %v1122
    %v1295 = vpack.c.b16 %v1131, %v1127
    %v1296 = vpack.c.b16 %v1132, %v1128
    %v1297 = vpack.c.b16 %v1133, %v1129
    %v1298 = vpack.c.b16 %v1134, %v1130
    %v1299 = vpack.c.b16 %v1139, %v1135
    %v1300 = vpack.c.b16 %v1140, %v1136
    %v1301 = vpack.c.b16 %v1141, %v1137
    %v1302 = vpack.c.b16 %v1142, %v1138
    %v1303 = vpack.c.b16 %v1147, %v1143
    %v1304 = vpack.c.b16 %v1148, %v1144
    %v1305 = vpack.c.b16 %v1149, %v1145
    %v1306 = vpack.c.b16 %v1150, %v1146
    %v1307 = vpack.c.b16 %v1155, %v1151
    %v1308 = vpack.c.b16 %v1156, %v1152
    %v1309 = vpack.c.b16 %v1157, %v1153
    %v1310 = vpack.c.b16 %v1158, %v1154
    %v1311 = vpack.c.b16 %v1163, %v1159
    %v1312 = vpack.c.b16 %v1164, %v1160
    %v1313 = vpack.c.b16 %v1165, %v1161
    %v1314 = vpack.c.b16 %v1166, %v1162
    %v1315 = vpack.c.b16 %v1171, %v1167
    %v1316 = vpack.c.b16 %v1172, %v1168
    %v1317 = vpack.c.b16 %v1173, %v1169
    %v1318 = vpack.c.b16 %v1174, %v1170
    %v1319 = vpack.c.b16 %v1179, %v1175
    %v1320 = vpack.c.b16 %v1180, %v1176
    %v1321 = vpack.c.b16 %v1181, %v1177
    %v1322 = vpack.c.b16 %v1182, %v1178
    %v1323 = vpack.c.b16 %v1187, %v1183
    %v1324 = vpack.c.b16 %v1188, %v1184
    %v1325 = vpack.c.b16 %v1189, %v1185
    %v1326 = vpack.c.b16 %v1190, %v1186
    %v1327 = vpack.c.b16 %v1195, %v1191
    %v1328 = vpack.c.b16 %v1196, %v1192
    %v1329 = vpack.c.b16 %v1197, %v1193
    %v1330 = vpack.c.b16 %v1198, %v1194
    %v1331 = vpack.c.b16 %v1203, %v1199
    %v1332 = vpack.c.b16 %v1204, %v1200
    %v1333 = vpack.c.b16 %v1205, %v1201
    %v1334 = vpack.c.b16 %v1206, %v1202
    %1463 = vmatprep.subr.bf16.mxu0 %v1208
    %1464 = vmatpush1.bf16.msra.mxu0 %v1207
    %1465 = vmatprep.subr.bf16.mxu0 %v1212
    %1466 = vmatpush1.bf16.msra.mxu0 %v1211
    %1467 = vmatprep.subr.bf16.mxu0 %v1216
    %1468 = vmatpush1.bf16.msra.mxu0 %v1215
    %1469 = vmatprep.subr.bf16.mxu0 %v1220
    %1470 = vmatpush1.bf16.msra.mxu0 %v1219
    %1471 = vmatprep.subr.bf16.mxu0 %v1224
    %1472 = vmatpush1.bf16.msra.mxu0 %v1223
    %1473 = vmatprep.subr.bf16.mxu0 %v1228
    %1474 = vmatpush1.bf16.msra.mxu0 %v1227
    %1475 = vmatprep.subr.bf16.mxu0 %v1232
    %1476 = vmatpush1.bf16.msra.mxu0 %v1231
    %1477 = vmatprep.subr.bf16.mxu0 %v1236
    %1478 = vmatpush1.bf16.msra.mxu0 %v1235
    %1479 = vmatprep.subr.bf16.mxu0 %v1240
    %1480 = vmatpush1.bf16.msra.mxu0 %v1239
    %1481 = vmatprep.subr.bf16.mxu0 %v1244
    %1482 = vmatpush1.bf16.msra.mxu0 %v1243
    %1483 = vmatprep.subr.bf16.mxu0 %v1248
    %1484 = vmatpush1.bf16.msra.mxu0 %v1247
    %1485 = vmatprep.subr.bf16.mxu0 %v1252
    %1486 = vmatpush1.bf16.msra.mxu0 %v1251
    %1487 = vmatprep.subr.bf16.mxu0 %v1256
    %1488 = vmatpush1.bf16.msra.mxu0 %v1255
    %1489 = vmatprep.subr.bf16.mxu0 %v1260
    %1490 = vmatpush1.bf16.msra.mxu0 %v1259
    %1491 = vmatprep.subr.bf16.mxu0 %v1264
    %1492 = vmatpush1.bf16.msra.mxu0 %v1263
    %1493 = vmatprep.subr.bf16.mxu0 %v1268
    %1494 = vmatpush1.bf16.msra.mxu0 %v1267
    %1495 = vmatprep.mubr.bf16.mxu0 %v670
    %1496 = vmatmul.mubr.bf16.gmra.mrb[0].mxu0 %v669
    %v1497 = vpop.f32.mrb[0].mxu0
    %v1498 = vadd.f32 %v806, %v1497
    %v1499 = vpop.f32.mrb[0].mxu0
    %v1500 = vadd.f32 %v810, %v1499
    %v1501 = vpop.f32.mrb[0].mxu0
    %v1502 = vpop.f32.mrb[0].mxu0
    %1503 = vdwg.mxu0
    %1504 = vmatprep.subr.bf16.mxu0 %v1272
    %1505 = vmatpush1.bf16.msra.mxu0 %v1271
    %1506 = vmatprep.subr.bf16.mxu0 %v1276
    %1507 = vmatpush1.bf16.msra.mxu0 %v1275
    %1508 = vmatprep.subr.bf16.mxu0 %v1280
    %1509 = vmatpush1.bf16.msra.mxu0 %v1279
    %1510 = vmatprep.subr.bf16.mxu0 %v1284
    %1511 = vmatpush1.bf16.msra.mxu0 %v1283
    %1512 = vmatprep.subr.bf16.mxu0 %v1288
    %1513 = vmatpush1.bf16.msra.mxu0 %v1287
    %1514 = vmatprep.subr.bf16.mxu0 %v1292
    %1515 = vmatpush1.bf16.msra.mxu0 %v1291
    %1516 = vmatprep.subr.bf16.mxu0 %v1296
    %1517 = vmatpush1.bf16.msra.mxu0 %v1295
    %1518 = vmatprep.subr.bf16.mxu0 %v1300
    %1519 = vmatpush1.bf16.msra.mxu0 %v1299
    %1520 = vmatprep.subr.bf16.mxu0 %v1304
    %1521 = vmatpush1.bf16.msra.mxu0 %v1303
    %1522 = vmatprep.subr.bf16.mxu0 %v1308
    %1523 = vmatpush1.bf16.msra.mxu0 %v1307
    %1524 = vmatprep.subr.bf16.mxu0 %v1312
    %1525 = vmatpush1.bf16.msra.mxu0 %v1311
    %1526 = vmatprep.subr.bf16.mxu0 %v1316
    %1527 = vmatpush1.bf16.msra.mxu0 %v1315
    %1528 = vmatprep.subr.bf16.mxu0 %v1320
    %1529 = vmatpush1.bf16.msra.mxu0 %v1319
    %1530 = vmatprep.subr.bf16.mxu0 %v1324
    %1531 = vmatpush1.bf16.msra.mxu0 %v1323
    %1532 = vmatprep.subr.bf16.mxu0 %v1328
    %1533 = vmatpush1.bf16.msra.mxu0 %v1327
    %1534 = vmatprep.subr.bf16.mxu0 %v1332
    %1535 = vmatpush1.bf16.msra.mxu0 %v1331
    %1536 = vmatprep.mubr.bf16.mxu0 %v672
    %1537 = vmatmul.mubr.bf16.gmra.mrb[0].mxu0 %v671
    %v1538 = vpop.f32.mrb[0].mxu0
    %v1539 = vadd.f32 %v1498, %v1538
    %v1540 = vpop.f32.mrb[0].mxu0
    %v1541 = vadd.f32 %v1500, %v1540
    %v1542 = vpop.f32.mrb[0].mxu0
    %v1543 = vpop.f32.mrb[0].mxu0
    %1544 = vdwg.mxu0
    %1545 = vmatprep.subr.bf16.mxu0 %v1210
    %1546 = vmatpush1.bf16.msra.mxu0 %v1209
    %1547 = vmatprep.subr.bf16.mxu0 %v1214
    %1548 = vmatpush1.bf16.msra.mxu0 %v1213
    %1549 = vmatprep.subr.bf16.mxu0 %v1218
    %1550 = vmatpush1.bf16.msra.mxu0 %v1217
    %1551 = vmatprep.subr.bf16.mxu0 %v1222
    %1552 = vmatpush1.bf16.msra.mxu0 %v1221
    %1553 = vmatprep.subr.bf16.mxu0 %v1226
    %1554 = vmatpush1.bf16.msra.mxu0 %v1225
    %1555 = vmatprep.subr.bf16.mxu0 %v1230
    %1556 = vmatpush1.bf16.msra.mxu0 %v1229
    %1557 = vmatprep.subr.bf16.mxu0 %v1234
    %1558 = vmatpush1.bf16.msra.mxu0 %v1233
    %1559 = vmatprep.subr.bf16.mxu0 %v1238
    %1560 = vmatpush1.bf16.msra.mxu0 %v1237
    %1561 = vmatprep.subr.bf16.mxu0 %v1242
    %1562 = vmatpush1.bf16.msra.mxu0 %v1241
    %1563 = vmatprep.subr.bf16.mxu0 %v1246
    %1564 = vmatpush1.bf16.msra.mxu0 %v1245
    %1565 = vmatprep.subr.bf16.mxu0 %v1250
    %1566 = vmatpush1.bf16.msra.mxu0 %v1249
    %1567 = vmatprep.subr.bf16.mxu0 %v1254
    %1568 = vmatpush1.bf16.msra.mxu0 %v1253
    %1569 = vmatprep.subr.bf16.mxu0 %v1258
    %1570 = vmatpush1.bf16.msra.mxu0 %v1257
    %1571 = vmatprep.subr.bf16.mxu0 %v1262
    %1572 = vmatpush1.bf16.msra.mxu0 %v1261
    %1573 = vmatprep.subr.bf16.mxu0 %v1266
    %1574 = vmatpush1.bf16.msra.mxu0 %v1265
    %1575 = vmatprep.subr.bf16.mxu0 %v1270
    %1576 = vmatpush1.bf16.msra.mxu0 %v1269
    %1577 = vmatprep.mubr.bf16.mxu0 %v670
    %1578 = vmatmul.mubr.bf16.gmra.mrb[0].mxu0 %v669
    %v1579 = vpop.f32.mrb[0].mxu0
    %v1580 = vadd.f32 %v814, %v1579
    %v1581 = vpop.f32.mrb[0].mxu0
    %v1582 = vadd.f32 %v818, %v1581
    %v1583 = vpop.f32.mrb[0].mxu0
    %v1584 = vpop.f32.mrb[0].mxu0
    %1585 = vdwg.mxu0
    %1586 = vmatprep.subr.bf16.mxu0 %v1274
    %1587 = vmatpush1.bf16.msra.mxu0 %v1273
    %1588 = vmatprep.subr.bf16.mxu0 %v1278
    %1589 = vmatpush1.bf16.msra.mxu0 %v1277
    %1590 = vmatprep.subr.bf16.mxu0 %v1282
    %1591 = vmatpush1.bf16.msra.mxu0 %v1281
    %1592 = vmatprep.subr.bf16.mxu0 %v1286
    %1593 = vmatpush1.bf16.msra.mxu0 %v1285
    %1594 = vmatprep.subr.bf16.mxu0 %v1290
    %1595 = vmatpush1.bf16.msra.mxu0 %v1289
    %1596 = vmatprep.subr.bf16.mxu0 %v1294
    %1597 = vmatpush1.bf16.msra.mxu0 %v1293
    %1598 = vmatprep.subr.bf16.mxu0 %v1298
    %1599 = vmatpush1.bf16.msra.mxu0 %v1297
    %1600 = vmatprep.subr.bf16.mxu0 %v1302
    %1601 = vmatpush1.bf16.msra.mxu0 %v1301
    %1602 = vmatprep.subr.bf16.mxu0 %v1306
    %1603 = vmatpush1.bf16.msra.mxu0 %v1305
    %1604 = vmatprep.subr.bf16.mxu0 %v1310
    %1605 = vmatpush1.bf16.msra.mxu0 %v1309
    %1606 = vmatprep.subr.bf16.mxu0 %v1314
    %1607 = vmatpush1.bf16.msra.mxu0 %v1313
    %1608 = vmatprep.subr.bf16.mxu0 %v1318
    %1609 = vmatpush1.bf16.msra.mxu0 %v1317
    %1610 = vmatprep.subr.bf16.mxu0 %v1322
    %1611 = vmatpush1.bf16.msra.mxu0 %v1321
    %1612 = vmatprep.subr.bf16.mxu0 %v1326
    %1613 = vmatpush1.bf16.msra.mxu0 %v1325
    %1614 = vmatprep.subr.bf16.mxu0 %v1330
    %1615 = vmatpush1.bf16.msra.mxu0 %v1329
    %1616 = vmatprep.subr.bf16.mxu0 %v1334
    %1617 = vmatpush1.bf16.msra.mxu0 %v1333
    %1618 = vmatprep.mubr.bf16.mxu0 %v672
    %1619 = vmatmul.mubr.bf16.gmra.mrb[0].mxu0 %v671
    %v1620 = vpop.f32.mrb[0].mxu0
    %v1621 = vadd.f32 %v1580, %v1620
    %v1622 = vpop.f32.mrb[0].mxu0
    %v1623 = vadd.f32 %v1582, %v1622
    %v1624 = vpop.f32.mrb[0].mxu0
    %v1625 = vpop.f32.mrb[0].mxu0
    %1626 = vdwg.mxu0
    %v1627 = vpack.c.bf16 %v1539, %v1539
    %v1628 = vpack.c.bf16 %v1541, %v1541
    %v1629 = vpack.c.bf16 %v1621, %v1621
    %v1630 = vpack.c.bf16 %v1623, %v1623
    %v1631 = vmax.bf16 %v1627, 0
    %v1632 = vmax.bf16 %v1628, 0
    %v1633 = vmax.bf16 %v1629, 0
    %v1634 = vmax.bf16 %v1630, 0
    %v1635 = vld [vmem:[#allocation10] sm:$0xf]
    %v1636 = vld [vmem:[#allocation10 + $0x4] sm:$0xf]
    %v1637 = vld [vmem:[#allocation10 + $0x8] sm:$0xf]
    %v1638 = vld [vmem:[#allocation10 + $0xc] sm:$0xf]
    %v1639 = vld [vmem:[#allocation10 + $0x10] sm:$0xf]
    %v1640 = vld [vmem:[#allocation10 + $0x14] sm:$0xf]
    %v1641 = vld [vmem:[#allocation10 + $0x18] sm:$0xf]
    %v1642 = vld [vmem:[#allocation10 + $0x1c] sm:$0xf]
    %v1643 = vld [vmem:[#allocation10 + $0x20] sm:$0xf]
    %v1644 = vld [vmem:[#allocation10 + $0x24] sm:$0xf]
    %v1645 = vld [vmem:[#allocation10 + $0x28] sm:$0xf]
    %v1646 = vld [vmem:[#allocation10 + $0x2c] sm:$0xf]
    %v1647 = vld [vmem:[#allocation10 + $0x30] sm:$0xf]
    %v1648 = vld [vmem:[#allocation10 + $0x34] sm:$0xf]
    %v1649 = vld [vmem:[#allocation10 + $0x38] sm:$0xf]
    %v1650 = vld [vmem:[#allocation10 + $0x3c] sm:$0xf]
    %v1651 = vld [vmem:[#allocation10 + $0x40] sm:$0xf]
    %v1652 = vld [vmem:[#allocation10 + $0x44] sm:$0xf]
    %v1653 = vld [vmem:[#allocation10 + $0x48] sm:$0xf]
    %v1654 = vld [vmem:[#allocation10 + $0x4c] sm:$0xf]
    %v1655 = vld [vmem:[#allocation10 + $0x50] sm:$0xf]
    %v1656 = vld [vmem:[#allocation10 + $0x54] sm:$0xf]
    %v1657 = vld [vmem:[#allocation10 + $0x58] sm:$0xf]
    %v1658 = vld [vmem:[#allocation10 + $0x5c] sm:$0xf]
    %v1659 = vld [vmem:[#allocation10 + $0x60] sm:$0xf]
    %v1660 = vld [vmem:[#allocation10 + $0x64] sm:$0xf]
    %v1661 = vld [vmem:[#allocation10 + $0x68] sm:$0xf]
    %v1662 = vld [vmem:[#allocation10 + $0x6c] sm:$0xf]
    %v1663 = vld [vmem:[#allocation10 + $0x70] sm:$0xf]
    %v1664 = vld [vmem:[#allocation10 + $0x74] sm:$0xf]
    %v1665 = vld [vmem:[#allocation10 + $0x78] sm:$0xf]
    %v1666 = vld [vmem:[#allocation10 + $0x7c] sm:$0xf]
    %v1667 = vld [vmem:[#allocation10 + $0x80] sm:$0xf]
    %v1668 = vld [vmem:[#allocation10 + $0x84] sm:$0xf]
    %v1669 = vld [vmem:[#allocation10 + $0x88] sm:$0xf]
    %v1670 = vld [vmem:[#allocation10 + $0x8c] sm:$0xf]
    %v1671 = vld [vmem:[#allocation10 + $0x90] sm:$0xf]
    %v1672 = vld [vmem:[#allocation10 + $0x94] sm:$0xf]
    %v1673 = vld [vmem:[#allocation10 + $0x98] sm:$0xf]
    %v1674 = vld [vmem:[#allocation10 + $0x9c] sm:$0xf]
    %v1675 = vld [vmem:[#allocation10 + $0xa0] sm:$0xf]
    %v1676 = vld [vmem:[#allocation10 + $0xa4] sm:$0xf]
    %v1677 = vld [vmem:[#allocation10 + $0xa8] sm:$0xf]
    %v1678 = vld [vmem:[#allocation10 + $0xac] sm:$0xf]
    %v1679 = vld [vmem:[#allocation10 + $0xb0] sm:$0xf]
    %v1680 = vld [vmem:[#allocation10 + $0xb4] sm:$0xf]
    %v1681 = vld [vmem:[#allocation10 + $0xb8] sm:$0xf]
    %v1682 = vld [vmem:[#allocation10 + $0xbc] sm:$0xf]
    %v1683 = vld [vmem:[#allocation10 + $0xc0] sm:$0xf]
    %v1684 = vld [vmem:[#allocation10 + $0xc4] sm:$0xf]
    %v1685 = vld [vmem:[#allocation10 + $0xc8] sm:$0xf]
    %v1686 = vld [vmem:[#allocation10 + $0xcc] sm:$0xf]
    %v1687 = vld [vmem:[#allocation10 + $0xd0] sm:$0xf]
    %v1688 = vld [vmem:[#allocation10 + $0xd4] sm:$0xf]
    %v1689 = vld [vmem:[#allocation10 + $0xd8] sm:$0xf]
    %v1690 = vld [vmem:[#allocation10 + $0xdc] sm:$0xf]
    %v1691 = vld [vmem:[#allocation10 + $0xe0] sm:$0xf]
    %v1692 = vld [vmem:[#allocation10 + $0xe4] sm:$0xf]
    %v1693 = vld [vmem:[#allocation10 + $0xe8] sm:$0xf]
    %v1694 = vld [vmem:[#allocation10 + $0xec] sm:$0xf]
    %v1695 = vld [vmem:[#allocation10 + $0xf0] sm:$0xf]
    %v1696 = vld [vmem:[#allocation10 + $0xf4] sm:$0xf]
    %v1697 = vld [vmem:[#allocation10 + $0xf8] sm:$0xf]
    %v1698 = vld [vmem:[#allocation10 + $0xfc] sm:$0xf]
    %v1699 = vld [vmem:[%s8] sm:$0x1]
    %v1701 = vlaneseq
    %v1702 = vshrl.u32 %v1701, 7
    %v1703 = vsub.s32 0, %v1702
    %v1704 = vrot.slane %v1699, %v1703
    %v1770 = vunpack.c.l.b16 %v1635
    %v1771 = vunpack.c.l.b16 %v1636
    %v1772 = vunpack.c.l.b16 %v1637
    %v1773 = vunpack.c.l.b16 %v1638
    %v1774 = vunpack.c.l.b16 %v1639
    %v1775 = vunpack.c.l.b16 %v1640
    %v1776 = vunpack.c.l.b16 %v1641
    %v1777 = vunpack.c.l.b16 %v1642
    %v1778 = vunpack.c.l.b16 %v1643
    %v1779 = vunpack.c.l.b16 %v1644
    %v1780 = vunpack.c.l.b16 %v1645
    %v1781 = vunpack.c.l.b16 %v1646
    %v1782 = vunpack.c.l.b16 %v1647
    %v1783 = vunpack.c.l.b16 %v1648
    %v1784 = vunpack.c.l.b16 %v1649
    %v1785 = vunpack.c.l.b16 %v1650
    %v1786 = vunpack.c.l.b16 %v1651
    %v1787 = vunpack.c.l.b16 %v1652
    %v1788 = vunpack.c.l.b16 %v1653
    %v1789 = vunpack.c.l.b16 %v1654
    %v1790 = vunpack.c.l.b16 %v1655
    %v1791 = vunpack.c.l.b16 %v1656
    %v1792 = vunpack.c.l.b16 %v1657
    %v1793 = vunpack.c.l.b16 %v1658
    %v1794 = vunpack.c.l.b16 %v1659
    %v1795 = vunpack.c.l.b16 %v1660
    %v1796 = vunpack.c.l.b16 %v1661
    %v1797 = vunpack.c.l.b16 %v1662
    %v1798 = vunpack.c.l.b16 %v1663
    %v1799 = vunpack.c.l.b16 %v1664
    %v1800 = vunpack.c.l.b16 %v1665
    %v1801 = vunpack.c.l.b16 %v1666
    %v1802 = vunpack.c.l.b16 %v1667
    %v1803 = vunpack.c.l.b16 %v1668
    %v1804 = vunpack.c.l.b16 %v1669
    %v1805 = vunpack.c.l.b16 %v1670
    %v1806 = vunpack.c.l.b16 %v1671
    %v1807 = vunpack.c.l.b16 %v1672
    %v1808 = vunpack.c.l.b16 %v1673
    %v1809 = vunpack.c.l.b16 %v1674
    %v1810 = vunpack.c.l.b16 %v1675
    %v1811 = vunpack.c.l.b16 %v1676
    %v1812 = vunpack.c.l.b16 %v1677
    %v1813 = vunpack.c.l.b16 %v1678
    %v1814 = vunpack.c.l.b16 %v1679
    %v1815 = vunpack.c.l.b16 %v1680
    %v1816 = vunpack.c.l.b16 %v1681
    %v1817 = vunpack.c.l.b16 %v1682
    %v1818 = vunpack.c.l.b16 %v1683
    %v1819 = vunpack.c.l.b16 %v1684
    %v1820 = vunpack.c.l.b16 %v1685
    %v1821 = vunpack.c.l.b16 %v1686
    %v1822 = vunpack.c.l.b16 %v1687
    %v1823 = vunpack.c.l.b16 %v1688
    %v1824 = vunpack.c.l.b16 %v1689
    %v1825 = vunpack.c.l.b16 %v1690
    %v1826 = vunpack.c.l.b16 %v1691
    %v1827 = vunpack.c.l.b16 %v1692
    %v1828 = vunpack.c.l.b16 %v1693
    %v1829 = vunpack.c.l.b16 %v1694
    %v1830 = vunpack.c.l.b16 %v1695
    %v1831 = vunpack.c.l.b16 %v1696
    %v1832 = vunpack.c.l.b16 %v1697
    %v1833 = vunpack.c.l.b16 %v1698
    %v1834 = vpack.c.b16 %v1771, %v1770
    %v1835 = vpack.c.b16 %v1773, %v1772
    %v1836 = vpack.c.b16 %v1775, %v1774
    %v1837 = vpack.c.b16 %v1777, %v1776
    %v1838 = vpack.c.b16 %v1779, %v1778
    %v1839 = vpack.c.b16 %v1781, %v1780
    %v1840 = vpack.c.b16 %v1783, %v1782
    %v1841 = vpack.c.b16 %v1785, %v1784
    %v1842 = vpack.c.b16 %v1787, %v1786
    %v1843 = vpack.c.b16 %v1789, %v1788
    %v1844 = vpack.c.b16 %v1791, %v1790
    %v1845 = vpack.c.b16 %v1793, %v1792
    %v1846 = vpack.c.b16 %v1795, %v1794
    %v1847 = vpack.c.b16 %v1797, %v1796
    %v1848 = vpack.c.b16 %v1799, %v1798
    %v1849 = vpack.c.b16 %v1801, %v1800
    %v1850 = vpack.c.b16 %v1803, %v1802
    %v1851 = vpack.c.b16 %v1805, %v1804
    %v1852 = vpack.c.b16 %v1807, %v1806
    %v1853 = vpack.c.b16 %v1809, %v1808
    %v1854 = vpack.c.b16 %v1811, %v1810
    %v1855 = vpack.c.b16 %v1813, %v1812
    %v1856 = vpack.c.b16 %v1815, %v1814
    %v1857 = vpack.c.b16 %v1817, %v1816
    %v1858 = vpack.c.b16 %v1819, %v1818
    %v1859 = vpack.c.b16 %v1821, %v1820
    %v1860 = vpack.c.b16 %v1823, %v1822
    %v1861 = vpack.c.b16 %v1825, %v1824
    %v1862 = vpack.c.b16 %v1827, %v1826
    %v1863 = vpack.c.b16 %v1829, %v1828
    %v1864 = vpack.c.b16 %v1831, %v1830
    %v1865 = vpack.c.b16 %v1833, %v1832
    %1898 = vmatprep.subr.bf16.mxu0 0
    %1899 = vmatpush1.bf16.msra.mxu0 %v1834
    %1900 = vmatprep.subr.bf16.mxu0 0
    %1901 = vmatpush1.bf16.msra.mxu0 %v1835
    %1902 = vmatprep.subr.bf16.mxu0 0
    %1903 = vmatpush1.bf16.msra.mxu0 %v1836
    %1904 = vmatprep.subr.bf16.mxu0 0
    %1905 = vmatpush1.bf16.msra.mxu0 %v1837
    %1906 = vmatprep.subr.bf16.mxu0 0
    %1907 = vmatpush1.bf16.msra.mxu0 %v1838
    %1908 = vmatprep.subr.bf16.mxu0 0
    %1909 = vmatpush1.bf16.msra.mxu0 %v1839
    %1910 = vmatprep.subr.bf16.mxu0 0
    %1911 = vmatpush1.bf16.msra.mxu0 %v1840
    %1912 = vmatprep.subr.bf16.mxu0 0
    %1913 = vmatpush1.bf16.msra.mxu0 %v1841
    %1914 = vmatprep.subr.bf16.mxu0 0
    %1915 = vmatpush1.bf16.msra.mxu0 %v1842
    %1916 = vmatprep.subr.bf16.mxu0 0
    %1917 = vmatpush1.bf16.msra.mxu0 %v1843
    %1918 = vmatprep.subr.bf16.mxu0 0
    %1919 = vmatpush1.bf16.msra.mxu0 %v1844
    %1920 = vmatprep.subr.bf16.mxu0 0
    %1921 = vmatpush1.bf16.msra.mxu0 %v1845
    %1922 = vmatprep.subr.bf16.mxu0 0
    %1923 = vmatpush1.bf16.msra.mxu0 %v1846
    %1924 = vmatprep.subr.bf16.mxu0 0
    %1925 = vmatpush1.bf16.msra.mxu0 %v1847
    %1926 = vmatprep.subr.bf16.mxu0 0
    %1927 = vmatpush1.bf16.msra.mxu0 %v1848
    %1928 = vmatprep.subr.bf16.mxu0 0
    %1929 = vmatpush1.bf16.msra.mxu0 %v1849
    %1930 = vmatprep.mubr.bf16.mxu0 %v1632
    %1931 = vmatmul.mubr.bf16.gmra.mrb[0].mxu0 %v1631
    %v1932 = vpop.f32.mrb[0].mxu0
    %v1933 = vadd.f32 %v1704, %v1932
    %v1934 = vpop.f32.mrb[0].mxu0
    %v1935 = vpop.f32.mrb[0].mxu0
    %v1936 = vpop.f32.mrb[0].mxu0
    %1937 = vdwg.mxu0
    %1938 = vmatprep.subr.bf16.mxu0 0
    %1939 = vmatpush1.bf16.msra.mxu0 %v1850
    %1940 = vmatprep.subr.bf16.mxu0 0
    %1941 = vmatpush1.bf16.msra.mxu0 %v1851
    %1942 = vmatprep.subr.bf16.mxu0 0
    %1943 = vmatpush1.bf16.msra.mxu0 %v1852
    %1944 = vmatprep.subr.bf16.mxu0 0
    %1945 = vmatpush1.bf16.msra.mxu0 %v1853
    %1946 = vmatprep.subr.bf16.mxu0 0
    %1947 = vmatpush1.bf16.msra.mxu0 %v1854
    %1948 = vmatprep.subr.bf16.mxu0 0
    %1949 = vmatpush1.bf16.msra.mxu0 %v1855
    %1950 = vmatprep.subr.bf16.mxu0 0
    %1951 = vmatpush1.bf16.msra.mxu0 %v1856
    %1952 = vmatprep.subr.bf16.mxu0 0
    %1953 = vmatpush1.bf16.msra.mxu0 %v1857
    %1954 = vmatprep.subr.bf16.mxu0 0
    %1955 = vmatpush1.bf16.msra.mxu0 %v1858
    %1956 = vmatprep.subr.bf16.mxu0 0
    %1957 = vmatpush1.bf16.msra.mxu0 %v1859
    %1958 = vmatprep.subr.bf16.mxu0 0
    %1959 = vmatpush1.bf16.msra.mxu0 %v1860
    %1960 = vmatprep.subr.bf16.mxu0 0
    %1961 = vmatpush1.bf16.msra.mxu0 %v1861
    %1962 = vmatprep.subr.bf16.mxu0 0
    %1963 = vmatpush1.bf16.msra.mxu0 %v1862
    %1964 = vmatprep.subr.bf16.mxu0 0
    %1965 = vmatpush1.bf16.msra.mxu0 %v1863
    %1966 = vmatprep.subr.bf16.mxu0 0
    %1967 = vmatpush1.bf16.msra.mxu0 %v1864
    %1968 = vmatprep.subr.bf16.mxu0 0
    %1969 = vmatpush1.bf16.msra.mxu0 %v1865
    %1970 = vmatprep.mubr.bf16.mxu0 %v1634
    %1971 = vmatmul.mubr.bf16.gmra.mrb[0].mxu0 %v1633
    %v1972 = vpop.f32.mrb[0].mxu0
    %v1973 = vadd.f32 %v1933, %v1972
    %v1974 = vpop.f32.mrb[0].mxu0
    %v1975 = vpop.f32.mrb[0].mxu0
    %v1976 = vpop.f32.mrb[0].mxu0
    %1977 = vdwg.mxu0
    %v1978 = vtanh.pop %v1973
    %v1979 = vld [vmem:[%s9] sm:$0x1]
    %v1981 = vlaneseq
    %v1982 = vshrl.u32 %v1981, 7
    %v1983 = vsub.s32 0, %v1982
    %v1984 = vrot.slane %v1979, %v1983
    %v1986 = vmul.f32 %v1984, %v1978
    %1987 = vst [vmem:[#allocation11] sm:$0xff] %v1986
    // Predicated region
    $region62: #{tpu_custom_call.1} parent=1 // pred_check
      _
    $region63: #{tpu_custom_call.1} parent=1 // pred_check_branch
      %1989 = sbr.rel (0) target = $region65
    $region64: #{tpu_custom_call.1} parent=1 // pred_region
      %s1991 = ssub.s32 128, 128
      %1992 = vsyncadd [#allocation4], %s1991
      %s1994 = sshll.u32 [#allocation11], 4
      %s1995 = int_to_ptr.vmem [resolvable:$true] %s1994
      %1997 = dma.vmem_to_hbm [thread:$0]  %s1995, 128, %s10, [#allocation4]
    $region65: #{tpu_custom_call.1} parent=1 // pred_fallthru
      _
    // Predicated region
    $region66: #{tpu_custom_call.1} parent=1 // pred_check
      _
    $region67: #{tpu_custom_call.1} parent=1 // pred_check_branch
      %1999 = sbr.rel (0) target = $region69
    $region68: #{tpu_custom_call.1} parent=1 // pred_region
      %2000 = dma.done [#allocation4], 128
    $region69: #{tpu_custom_call.1} parent=1 // pred_fallthru
      _
    %2001 = vsyncpa [#allocation3], 1
    %2002 = vsyncpa [#allocation6], 1
    %2003 = vsyncpa [#allocation9], 1
    %2004 = vsyncpa [#allocation4], 1

</llo_original>
